<compile_context>
chip_gen: v6e
topology: v6e:2x2x1
jax: 0.10.0
libtpu: 0.0.40
codegen_flags: <defaults>
</compile_context>

<pallas_src>
import jax
import jax.numpy as jnp
import numpy as np
from jax.experimental import pallas as pl
from jax.experimental.pallas import tpu as pltpu

# ----------------------------- configuration -----------------------------
CHANNELS = 4
HALF = CHANNELS // 2
HIDDEN = 32
KERNEL_SIZE = 3
DILATION_RATE = 2
N_LAYERS = 3
B = 2
T = 128


# ------------------------------- kernel ----------------------------------
def coupling_kernel(x_ref, mask_ref,
                    pre_w_ref, pre_b_ref,
                    in_w_ref, in_b_ref,
                    rs_w_ref, rs_b_ref,
                    post_w_ref, post_b_ref,
                    out_ref, logs_ref):
    f32 = jnp.float32
    bf16 = jnp.bfloat16

    x0_raw = x_ref[:HALF, :]                  # (HALF, T), original dtype
    x0 = x0_raw.astype(f32)
    x1 = x_ref[HALF:, :].astype(f32)
    mask = mask_ref[...].astype(f32)          # (1, T)
    t = x0.shape[1]

    # lane position inside this batch row -> zero-'same'-padding validity
    pos = jax.lax.broadcasted_iota(jnp.int32, (1, t), 1)

    # pre: 1x1 conv with K = HALF = 2 as two VPU broadcast-FMAs.
    # NOTE: kept on the VPU; the review's "move the K=2 dot onto the idle
    # MXU" suggestion is measurement-gated and the delta is ~16 vreg-ops.
    pre_w = pre_w_ref[...].astype(f32)        # (HIDDEN, HALF)
    h = pre_b_ref[...].astype(f32)            # (HIDDEN, 1) -> broadcasts
    for c in range(HALF):
        h = h + pre_w[:, c:c + 1] * x0[c:c + 1, :]
    h = h * mask                              # (HIDDEN, T), f32

    skip = jnp.zeros((HIDDEN, t), f32)
    for i in range(N_LAYERS):
        dil = DILATION_RATE ** i

        def side_tap_bf16(o):
            # h[:, l + o], zero-padded outside [0, T), as a bf16 MXU operand
            rolled = pltpu.roll(h, shift=(-o) % t, axis=1)
            valid = jnp.logical_and(pos + o >= 0, pos + o < t).astype(f32)
            return (rolled * valid).astype(bf16)

        # dilated conv: three accumulated K=HIDDEN dots (no tap-concat copy)
        x_in = in_b_ref[i].astype(f32)        # (2*HIDDEN, 1) -> broadcasts
        x_in = x_in + jnp.dot(in_w_ref[i, 0], side_tap_bf16(-dil),
                              preferred_element_type=f32)
        x_in = x_in + jnp.dot(in_w_ref[i, 1], h.astype(bf16),
                              preferred_element_type=f32)
        x_in = x_in + jnp.dot(in_w_ref[i, 2], side_tap_bf16(dil),
                              preferred_element_type=f32)

        # fused_add_tanh_sigmoid_multiply (g = 0);
        # sigmoid(x) = 0.5*(1 + tanh(0.5*x)) -> one EUP push per vreg
        acts = jnp.tanh(x_in[:HIDDEN]) * (
            0.5 * (1.0 + jnp.tanh(0.5 * x_in[HIDDEN:])))

        # res/skip 1x1 conv (last layer's weights live in the skip half)
        rs = jnp.dot(rs_w_ref[i], acts.astype(bf16),
                     preferred_element_type=f32) + rs_b_ref[i]
        h = (h + rs[:HIDDEN]) * mask
        skip = skip + rs[HIDDEN:]

    skip = skip * mask

    # post: 1x1 conv -> stats, masked
    stats = jnp.dot(post_w_ref[...], skip.astype(bf16),
                    preferred_element_type=f32) + post_b_ref[...]
    stats = stats * mask                      # (CHANNELS, T), f32

    m = stats[:HALF]
    logs = stats[HALF:]
    y1 = m + x1 * jnp.exp(logs) * mask

    # two row-slice stores: untouched x0 passthrough + coupled half
    out_ref[:HALF, :] = x0_raw
    out_ref[HALF:, :] = y1.astype(out_ref.dtype)
    # lane-dense per-position logdet contribution (masked); reduced in wrapper
    logs_ref[...] = jnp.sum(logs, axis=0, keepdims=True)


# ------------------------------- wrapper ----------------------------------
@jax.jit
def residual_coupling_forward(x, x_mask, params):
    b, c, t = x.shape
    bf16 = jnp.bfloat16

    # MXU-operand weights pre-cast to bf16 once in the wrapper
    in_w_bf = params["in_w"].astype(bf16)       # (L, K, 2H, H)
    rs_w_bf = params["rs_w"].astype(bf16)       # (L, 2H, H)
    post_w_bf = params["post_w"].astype(bf16)   # (C, H)

    def act_spec(ch):
        # one batch row per grid step; leading batch dim squeezed out
        return pl.BlockSpec((None, ch, t), lambda bi: (bi, 0, 0))

    def weight_spec(shape):
        nd = len(shape)
        # grid-invariant: weights stay VMEM-resident across batch steps
        return pl.BlockSpec(shape, lambda bi, _nd=nd: (0,) * _nd)

    grid_spec = pltpu.PrefetchScalarGridSpec(
        num_scalar_prefetch=0,
        grid=(b,),
        in_specs=[
            act_spec(c),                        # x        (B, C, T)
            act_spec(1),                        # x_mask   (B, 1, T)
            weight_spec(params["pre_w"].shape),
            weight_spec(params["pre_b"].shape),
            weight_spec(in_w_bf.shape),
            weight_spec(params["in_b"].shape),
            weight_spec(rs_w_bf.shape),
            weight_spec(params["rs_b"].shape),
            weight_spec(post_w_bf.shape),
            weight_spec(params["post_b"].shape),
        ],
        out_specs=(
            act_spec(c),                        # coupled output  (B, C, T)
            act_spec(1),                        # masked log-scales (B, 1, T)
        ),
    )

    out, logs_rows = pl.pallas_call(
        coupling_kernel,
        out_shape=(
            jax.ShapeDtypeStruct((b, c, t), x.dtype),
            jax.ShapeDtypeStruct((b, 1, t), jnp.float32),
        ),
        grid_spec=grid_spec,
        compiler_params=pltpu.CompilerParams(
            dimension_semantics=("parallel",)),
    )(x, x_mask,
      params["pre_w"], params["pre_b"],
      in_w_bf, params["in_b"],
      rs_w_bf, params["rs_b"],
      post_w_bf, params["post_b"])

    logdet = jnp.sum(logs_rows, axis=(1, 2))
    return out, logdet


# --------------------------- pure-JAX reference ----------------------------
def reference_forward(x, x_mask, params):
    t = x.shape[-1]
    x0, x1 = x[:, :HALF], x[:, HALF:]
    h = jnp.einsum("oc,bct->bot", params["pre_w"], x0) + params["pre_b"][None]
    h = h * x_mask
    skip = jnp.zeros_like(h)
    for i in range(N_LAYERS):
        dil = DILATION_RATE ** i
        pad = dil * (KERNEL_SIZE - 1) // 2
        hp = jnp.pad(h, ((0, 0), (0, 0), (pad, pad)))
        x_in = sum(
            jnp.einsum("oc,bct->bot", params["in_w"][i, j],
                       hp[:, :, j * dil:j * dil + t])
            for j in range(KERNEL_SIZE)
        ) + params["in_b"][i][None]
        acts = jnp.tanh(x_in[:, :HIDDEN]) * jax.nn.sigmoid(x_in[:, HIDDEN:])
        rs = jnp.einsum("oc,bct->bot", params["rs_w"][i], acts) + params["rs_b"][i][None]
        h = (h + rs[:, :HIDDEN]) * x_mask
        skip = skip + rs[:, HIDDEN:]
    skip = skip * x_mask
    stats = jnp.einsum("oc,bct->bot", params["post_w"], skip) + params["post_b"][None]
    stats = stats * x_mask
    m, logs = stats[:, :HALF], stats[:, HALF:]
    y1 = m + x1 * jnp.exp(logs) * x_mask
    return jnp.concatenate([x0, y1], axis=1), jnp.sum(logs, axis=(1, 2))


# --------------------------------- main ------------------------------------
def make_params(key):
    ks = jax.random.split(key, 8)
    pre_w = 0.1 * jax.random.normal(ks[0], (HIDDEN, HALF), jnp.float32)
    pre_b = 0.1 * jax.random.normal(ks[1], (HIDDEN, 1), jnp.float32)
    # dilated in_layers: [layer, tap, out=2*HIDDEN, in=HIDDEN]
    in_w = 0.1 * jax.random.normal(ks[2], (N_LAYERS, KERNEL_SIZE, 2 * HIDDEN, HIDDEN), jnp.float32)
    in_b = 0.1 * jax.random.normal(ks[3], (N_LAYERS, 2 * HIDDEN, 1), jnp.float32)
    # res/skip 1x1 layers, unified to 2*HIDDEN outputs; last layer has only a
    # skip half (PyTorch: Conv1d(hidden, hidden)) -> stored in rows [HIDDEN:],
    # res half zeroed (the residual update of the last layer is unused).
    rs_w = 0.1 * jax.random.normal(ks[4], (N_LAYERS, 2 * HIDDEN, HIDDEN), jnp.float32)
    rs_b = 0.1 * jax.random.normal(ks[5], (N_LAYERS, 2 * HIDDEN, 1), jnp.float32)
    rs_w = rs_w.at[N_LAYERS - 1, :HIDDEN].set(0.0)
    rs_b = rs_b.at[N_LAYERS - 1, :HIDDEN].set(0.0)
    # post 1x1 conv: half*(2 - mean_only) = CHANNELS outputs (mean_only=False)
    post_w = 0.05 * jax.random.normal(ks[6], (CHANNELS, HIDDEN), jnp.float32)
    post_b = 0.05 * jax.random.normal(ks[7], (CHANNELS, 1), jnp.float32)
    return dict(pre_w=pre_w, pre_b=pre_b, in_w=in_w, in_b=in_b,
                rs_w=rs_w, rs_b=rs_b, post_w=post_w, post_b=post_b)


if __name__ == "__main__":
    key = jax.random.PRNGKey(0)
    k_x, k_p = jax.random.split(key)
    x = jax.random.normal(k_x, (B, CHANNELS, T), jnp.float32)
    lengths = jnp.array([T, 3 * T // 4], jnp.int32)
    x_mask = (jnp.arange(T)[None, None, :] < lengths[:, None, None]).astype(jnp.float32)
    params = make_params(k_p)

    out, logdet = residual_coupling_forward(x, x_mask, params)
    out = jax.block_until_ready(out)
    logdet = jax.block_until_ready(logdet)

    ref_out, ref_logdet = reference_forward(x, x_mask, params)
    # Kernel uses bf16 MXU operands (f32 accumulation/elementwise); reference
    # is pure f32, so per-element error is O(1e-4..1e-3) and the logdet sum
    # over ~B*T masked positions accumulates to O(1e-3..1e-2).
    np.testing.assert_allclose(np.asarray(out), np.asarray(ref_out),
                               rtol=5e-3, atol=5e-3)
    np.testing.assert_allclose(np.asarray(logdet), np.asarray(ref_logdet),
                               rtol=3e-2, atol=3e-2)

    print("KERNEL_OK")
</pallas_src>

<mosaic_0001>
module attributes {stable_mosaic.version = 11 : i64} {
  func.func @coupling_kernel(%arg0: i32, %arg1: memref<1x4x128xf32, #tpu.memory_space<vmem>>, %arg2: memref<1x1x128xf32, #tpu.memory_space<vmem>>, %arg3: memref<32x2xf32, #tpu.memory_space<vmem>>, %arg4: memref<32x1xf32, #tpu.memory_space<vmem>>, %arg5: memref<3x3x64x32xbf16, #tpu.memory_space<vmem>>, %arg6: memref<3x64x1xf32, #tpu.memory_space<vmem>>, %arg7: memref<3x64x32xbf16, #tpu.memory_space<vmem>>, %arg8: memref<3x64x1xf32, #tpu.memory_space<vmem>>, %arg9: memref<4x32xbf16, #tpu.memory_space<vmem>>, %arg10: memref<4x1xf32, #tpu.memory_space<vmem>>, %arg11: memref<1x4x128xf32, #tpu.memory_space<vmem>>, %arg12: memref<1x1x128xf32, #tpu.memory_space<vmem>>) attributes {dimension_semantics = [#tpu.dimension_semantics<parallel>], iteration_bounds = array<i64: 2>, scalar_prefetch = 0 : i64, scratch_operands = 0 : i64, tpu.core_type = #tpu.core_type<tc>, window_params = [{transform_indices = @transform_0, window_bounds = array<i64: 1, 4, 128>}, {transform_indices = @transform_1, window_bounds = array<i64: 1, 1, 128>}, {pipeline_mode = #tpu.pipeline_mode<synchronous>, transform_indices = @transform_2, window_bounds = array<i64: 32, 2>}, {pipeline_mode = #tpu.pipeline_mode<synchronous>, transform_indices = @transform_3, window_bounds = array<i64: 32, 1>}, {pipeline_mode = #tpu.pipeline_mode<synchronous>, transform_indices = @transform_4, window_bounds = array<i64: 3, 3, 64, 32>}, {pipeline_mode = #tpu.pipeline_mode<synchronous>, transform_indices = @transform_5, window_bounds = array<i64: 3, 64, 1>}, {pipeline_mode = #tpu.pipeline_mode<synchronous>, transform_indices = @transform_6, window_bounds = array<i64: 3, 64, 32>}, {pipeline_mode = #tpu.pipeline_mode<synchronous>, transform_indices = @transform_7, window_bounds = array<i64: 3, 64, 1>}, {pipeline_mode = #tpu.pipeline_mode<synchronous>, transform_indices = @transform_8, window_bounds = array<i64: 4, 32>}, {pipeline_mode = #tpu.pipeline_mode<synchronous>, transform_indices = @transform_9, window_bounds = array<i64: 4, 1>}, {transform_indices = @transform_10, window_bounds = array<i64: 1, 4, 128>}, {transform_indices = @transform_11, window_bounds = array<i64: 1, 1, 128>}]} {
    %c0 = arith.constant 0 : index
    %c0_0 = arith.constant 0 : index
    %c0_1 = arith.constant 0 : index
    %0 = vector.load %arg1[%c0, %c0_0, %c0_1] : memref<1x4x128xf32, #tpu.memory_space<vmem>>, vector<1x2x128xf32>
    %1 = vector.shape_cast %0 : vector<1x2x128xf32> to vector<2x128xf32>
    %c0_2 = arith.constant 0 : index
    %c2 = arith.constant 2 : index
    %c0_3 = arith.constant 0 : index
    %2 = vector.load %arg1[%c0_2, %c2, %c0_3] : memref<1x4x128xf32, #tpu.memory_space<vmem>>, vector<1x2x128xf32>
    %3 = vector.shape_cast %2 : vector<1x2x128xf32> to vector<2x128xf32>
    %c0_4 = arith.constant 0 : index
    %c0_5 = arith.constant 0 : index
    %c0_6 = arith.constant 0 : index
    %4 = vector.load %arg2[%c0_4, %c0_5, %c0_6] : memref<1x1x128xf32, #tpu.memory_space<vmem>>, vector<1x1x128xf32>
    %5 = vector.shape_cast %4 : vector<1x1x128xf32> to vector<1x128xf32>
    %6 = tpu.iota {dimensions = array<i32: 1>} : vector<1x128xi32>
    %c0_7 = arith.constant 0 : index
    %c0_8 = arith.constant 0 : index
    %7 = vector.load %arg3[%c0_7, %c0_8] : memref<32x2xf32, #tpu.memory_space<vmem>>, vector<32x2xf32>
    %c0_9 = arith.constant 0 : index
    %c0_10 = arith.constant 0 : index
    %8 = vector.load %arg4[%c0_9, %c0_10] : memref<32x1xf32, #tpu.memory_space<vmem>>, vector<32x1xf32>
    %9 = vector.extract_strided_slice %7 {offsets = [0, 0], sizes = [32, 1], strides = [1, 1]} : vector<32x2xf32> to vector<32x1xf32>
    %10 = vector.extract_strided_slice %1 {offsets = [0, 0], sizes = [1, 128], strides = [1, 1]} : vector<2x128xf32> to vector<1x128xf32>
    %11 = vector.broadcast %9 : vector<32x1xf32> to vector<32x128xf32>
    %12 = vector.broadcast %10 : vector<1x128xf32> to vector<32x128xf32>
    %13 = arith.mulf %11, %12 : vector<32x128xf32>
    %14 = vector.broadcast %8 : vector<32x1xf32> to vector<32x128xf32>
    %15 = arith.addf %14, %13 : vector<32x128xf32>
    %16 = vector.extract_strided_slice %7 {offsets = [0, 1], sizes = [32, 1], strides = [1, 1]} : vector<32x2xf32> to vector<32x1xf32>
    %17 = vector.extract_strided_slice %1 {offsets = [1, 0], sizes = [1, 128], strides = [1, 1]} : vector<2x128xf32> to vector<1x128xf32>
    %18 = vector.broadcast %16 : vector<32x1xf32> to vector<32x128xf32>
    %19 = vector.broadcast %17 : vector<1x128xf32> to vector<32x128xf32>
    %20 = arith.mulf %18, %19 : vector<32x128xf32>
    %21 = arith.addf %15, %20 : vector<32x128xf32>
    %22 = vector.broadcast %5 : vector<1x128xf32> to vector<32x128xf32>
    %23 = arith.mulf %21, %22 : vector<32x128xf32>
    %cst = arith.constant 0.000000e+00 : f32
    %24 = vector.broadcast %cst : f32 to vector<32x128xf32>
    %c0_11 = arith.constant 0 : index
    %c0_12 = arith.constant 0 : index
    %c0_13 = arith.constant 0 : index
    %25 = vector.load %arg6[%c0_11, %c0_12, %c0_13] : memref<3x64x1xf32, #tpu.memory_space<vmem>>, vector<1x64x1xf32>
    %26 = vector.shape_cast %25 : vector<1x64x1xf32> to vector<64x1xf32>
    %c0_14 = arith.constant 0 : index
    %c0_15 = arith.constant 0 : index
    %c0_16 = arith.constant 0 : index
    %c0_17 = arith.constant 0 : index
    %27 = vector.load %arg5[%c0_14, %c0_15, %c0_16, %c0_17] : memref<3x3x64x32xbf16, #tpu.memory_space<vmem>>, vector<1x1x64x32xbf16>
    %28 = vector.shape_cast %27 : vector<1x1x64x32xbf16> to vector<64x32xbf16>
    %c1_i32 = arith.constant 1 : i32
    %29 = tpu.dynamic_rotate %23 by %c1_i32 dim 1 : vector<32x128xf32>, i32 -> vector<32x128xf32>
    %c-1_i32 = arith.constant -1 : i32
    %30 = vector.broadcast %c-1_i32 : i32 to vector<1x128xi32>
    %31 = arith.addi %6, %30 : vector<1x128xi32>
    %c0_i32 = arith.constant 0 : i32
    %32 = vector.broadcast %c0_i32 : i32 to vector<1x128xi32>
    %33 = arith.cmpi sge, %31, %32 : vector<1x128xi32>
    %c-1_i32_18 = arith.constant -1 : i32
    %34 = vector.broadcast %c-1_i32_18 : i32 to vector<1x128xi32>
    %35 = arith.addi %6, %34 : vector<1x128xi32>
    %c128_i32 = arith.constant 128 : i32
    %36 = vector.broadcast %c128_i32 : i32 to vector<1x128xi32>
    %37 = arith.cmpi slt, %35, %36 : vector<1x128xi32>
    %38 = arith.andi %33, %37 : vector<1x128xi1>
    %39 = arith.extui %38 : vector<1x128xi1> to vector<1x128xi32>
    %40 = arith.sitofp %39 : vector<1x128xi32> to vector<1x128xf32>
    %41 = vector.broadcast %40 : vector<1x128xf32> to vector<32x128xf32>
    %42 = arith.mulf %29, %41 : vector<32x128xf32>
    %43 = arith.truncf %42 : vector<32x128xf32> to vector<32x128xbf16>
    %cst_19 = arith.constant dense<0.000000e+00> : vector<64x128xf32>
    %44 = tpu.matmul %28, %43, %cst_19 {dimension_numbers = #tpu.dot_dimension_numbers<[1], [0], [0], [1], [0, 0, 1, 1], [], []>} : vector<64x32xbf16>, vector<32x128xbf16>, vector<64x128xf32> -> vector<64x128xf32>
    %45 = vector.broadcast %26 : vector<64x1xf32> to vector<64x128xf32>
    %46 = arith.addf %45, %44 : vector<64x128xf32>
    %c0_20 = arith.constant 0 : index
    %c1 = arith.constant 1 : index
    %c0_21 = arith.constant 0 : index
    %c0_22 = arith.constant 0 : index
    %47 = vector.load %arg5[%c0_20, %c1, %c0_21, %c0_22] : memref<3x3x64x32xbf16, #tpu.memory_space<vmem>>, vector<1x1x64x32xbf16>
    %48 = vector.shape_cast %47 : vector<1x1x64x32xbf16> to vector<64x32xbf16>
    %49 = arith.truncf %23 : vector<32x128xf32> to vector<32x128xbf16>
    %cst_23 = arith.constant dense<0.000000e+00> : vector<64x128xf32>
    %50 = tpu.matmul %48, %49, %cst_23 {dimension_numbers = #tpu.dot_dimension_numbers<[1], [0], [0], [1], [0, 0, 1, 1], [], []>} : vector<64x32xbf16>, vector<32x128xbf16>, vector<64x128xf32> -> vector<64x128xf32>
    %51 = arith.addf %46, %50 : vector<64x128xf32>
    %c0_24 = arith.constant 0 : index
    %c2_25 = arith.constant 2 : index
    %c0_26 = arith.constant 0 : index
    %c0_27 = arith.constant 0 : index
    %52 = vector.load %arg5[%c0_24, %c2_25, %c0_26, %c0_27] : memref<3x3x64x32xbf16, #tpu.memory_space<vmem>>, vector<1x1x64x32xbf16>
    %53 = vector.shape_cast %52 : vector<1x1x64x32xbf16> to vector<64x32xbf16>
    %c127_i32 = arith.constant 127 : i32
    %54 = tpu.dynamic_rotate %23 by %c127_i32 dim 1 : vector<32x128xf32>, i32 -> vector<32x128xf32>
    %c1_i32_28 = arith.constant 1 : i32
    %55 = vector.broadcast %c1_i32_28 : i32 to vector<1x128xi32>
    %56 = arith.addi %6, %55 : vector<1x128xi32>
    %c0_i32_29 = arith.constant 0 : i32
    %57 = vector.broadcast %c0_i32_29 : i32 to vector<1x128xi32>
    %58 = arith.cmpi sge, %56, %57 : vector<1x128xi32>
    %c1_i32_30 = arith.constant 1 : i32
    %59 = vector.broadcast %c1_i32_30 : i32 to vector<1x128xi32>
    %60 = arith.addi %6, %59 : vector<1x128xi32>
    %c128_i32_31 = arith.constant 128 : i32
    %61 = vector.broadcast %c128_i32_31 : i32 to vector<1x128xi32>
    %62 = arith.cmpi slt, %60, %61 : vector<1x128xi32>
    %63 = arith.andi %58, %62 : vector<1x128xi1>
    %64 = arith.extui %63 : vector<1x128xi1> to vector<1x128xi32>
    %65 = arith.sitofp %64 : vector<1x128xi32> to vector<1x128xf32>
    %66 = vector.broadcast %65 : vector<1x128xf32> to vector<32x128xf32>
    %67 = arith.mulf %54, %66 : vector<32x128xf32>
    %68 = arith.truncf %67 : vector<32x128xf32> to vector<32x128xbf16>
    %cst_32 = arith.constant dense<0.000000e+00> : vector<64x128xf32>
    %69 = tpu.matmul %53, %68, %cst_32 {dimension_numbers = #tpu.dot_dimension_numbers<[1], [0], [0], [1], [0, 0, 1, 1], [], []>} : vector<64x32xbf16>, vector<32x128xbf16>, vector<64x128xf32> -> vector<64x128xf32>
    %70 = arith.addf %51, %69 : vector<64x128xf32>
    %71 = vector.extract_strided_slice %70 {offsets = [0, 0], sizes = [32, 128], strides = [1, 1]} : vector<64x128xf32> to vector<32x128xf32>
    %72 = math.tanh %71 : vector<32x128xf32>
    %73 = vector.extract_strided_slice %70 {offsets = [32, 0], sizes = [32, 128], strides = [1, 1]} : vector<64x128xf32> to vector<32x128xf32>
    %cst_33 = arith.constant 5.000000e-01 : f32
    %74 = vector.broadcast %cst_33 : f32 to vector<32x128xf32>
    %75 = arith.mulf %74, %73 : vector<32x128xf32>
    %76 = math.tanh %75 : vector<32x128xf32>
    %cst_34 = arith.constant 1.000000e+00 : f32
    %77 = vector.broadcast %cst_34 : f32 to vector<32x128xf32>
    %78 = arith.addf %77, %76 : vector<32x128xf32>
    %cst_35 = arith.constant 5.000000e-01 : f32
    %79 = vector.broadcast %cst_35 : f32 to vector<32x128xf32>
    %80 = arith.mulf %79, %78 : vector<32x128xf32>
    %81 = arith.mulf %72, %80 : vector<32x128xf32>
    %c0_36 = arith.constant 0 : index
    %c0_37 = arith.constant 0 : index
    %c0_38 = arith.constant 0 : index
    %82 = vector.load %arg7[%c0_36, %c0_37, %c0_38] : memref<3x64x32xbf16, #tpu.memory_space<vmem>>, vector<1x64x32xbf16>
    %83 = vector.shape_cast %82 : vector<1x64x32xbf16> to vector<64x32xbf16>
    %84 = arith.truncf %81 : vector<32x128xf32> to vector<32x128xbf16>
    %cst_39 = arith.constant dense<0.000000e+00> : vector<64x128xf32>
    %85 = tpu.matmul %83, %84, %cst_39 {dimension_numbers = #tpu.dot_dimension_numbers<[1], [0], [0], [1], [0, 0, 1, 1], [], []>} : vector<64x32xbf16>, vector<32x128xbf16>, vector<64x128xf32> -> vector<64x128xf32>
    %c0_40 = arith.constant 0 : index
    %c0_41 = arith.constant 0 : index
    %c0_42 = arith.constant 0 : index
    %86 = vector.load %arg8[%c0_40, %c0_41, %c0_42] : memref<3x64x1xf32, #tpu.memory_space<vmem>>, vector<1x64x1xf32>
    %87 = vector.shape_cast %86 : vector<1x64x1xf32> to vector<64x1xf32>
    %88 = vector.broadcast %87 : vector<64x1xf32> to vector<64x128xf32>
    %89 = arith.addf %85, %88 : vector<64x128xf32>
    %90 = vector.extract_strided_slice %89 {offsets = [0, 0], sizes = [32, 128], strides = [1, 1]} : vector<64x128xf32> to vector<32x128xf32>
    %91 = arith.addf %23, %90 : vector<32x128xf32>
    %92 = vector.broadcast %5 : vector<1x128xf32> to vector<32x128xf32>
    %93 = arith.mulf %91, %92 : vector<32x128xf32>
    %94 = vector.extract_strided_slice %89 {offsets = [32, 0], sizes = [32, 128], strides = [1, 1]} : vector<64x128xf32> to vector<32x128xf32>
    %95 = arith.addf %24, %94 : vector<32x128xf32>
    %c1_43 = arith.constant 1 : index
    %c0_44 = arith.constant 0 : index
    %c0_45 = arith.constant 0 : index
    %96 = vector.load %arg6[%c1_43, %c0_44, %c0_45] : memref<3x64x1xf32, #tpu.memory_space<vmem>>, vector<1x64x1xf32>
    %97 = vector.shape_cast %96 : vector<1x64x1xf32> to vector<64x1xf32>
    %c1_46 = arith.constant 1 : index
    %c0_47 = arith.constant 0 : index
    %c0_48 = arith.constant 0 : index
    %c0_49 = arith.constant 0 : index
    %98 = vector.load %arg5[%c1_46, %c0_47, %c0_48, %c0_49] : memref<3x3x64x32xbf16, #tpu.memory_space<vmem>>, vector<1x1x64x32xbf16>
    %99 = vector.shape_cast %98 : vector<1x1x64x32xbf16> to vector<64x32xbf16>
    %c2_i32 = arith.constant 2 : i32
    %100 = tpu.dynamic_rotate %93 by %c2_i32 dim 1 : vector<32x128xf32>, i32 -> vector<32x128xf32>
    %c-2_i32 = arith.constant -2 : i32
    %101 = vector.broadcast %c-2_i32 : i32 to vector<1x128xi32>
    %102 = arith.addi %6, %101 : vector<1x128xi32>
    %c0_i32_50 = arith.constant 0 : i32
    %103 = vector.broadcast %c0_i32_50 : i32 to vector<1x128xi32>
    %104 = arith.cmpi sge, %102, %103 : vector<1x128xi32>
    %c-2_i32_51 = arith.constant -2 : i32
    %105 = vector.broadcast %c-2_i32_51 : i32 to vector<1x128xi32>
    %106 = arith.addi %6, %105 : vector<1x128xi32>
    %c128_i32_52 = arith.constant 128 : i32
    %107 = vector.broadcast %c128_i32_52 : i32 to vector<1x128xi32>
    %108 = arith.cmpi slt, %106, %107 : vector<1x128xi32>
    %109 = arith.andi %104, %108 : vector<1x128xi1>
    %110 = arith.extui %109 : vector<1x128xi1> to vector<1x128xi32>
    %111 = arith.sitofp %110 : vector<1x128xi32> to vector<1x128xf32>
    %112 = vector.broadcast %111 : vector<1x128xf32> to vector<32x128xf32>
    %113 = arith.mulf %100, %112 : vector<32x128xf32>
    %114 = arith.truncf %113 : vector<32x128xf32> to vector<32x128xbf16>
    %cst_53 = arith.constant dense<0.000000e+00> : vector<64x128xf32>
    %115 = tpu.matmul %99, %114, %cst_53 {dimension_numbers = #tpu.dot_dimension_numbers<[1], [0], [0], [1], [0, 0, 1, 1], [], []>} : vector<64x32xbf16>, vector<32x128xbf16>, vector<64x128xf32> -> vector<64x128xf32>
    %116 = vector.broadcast %97 : vector<64x1xf32> to vector<64x128xf32>
    %117 = arith.addf %116, %115 : vector<64x128xf32>
    %c1_54 = arith.constant 1 : index
    %c1_55 = arith.constant 1 : index
    %c0_56 = arith.constant 0 : index
    %c0_57 = arith.constant 0 : index
    %118 = vector.load %arg5[%c1_54, %c1_55, %c0_56, %c0_57] : memref<3x3x64x32xbf16, #tpu.memory_space<vmem>>, vector<1x1x64x32xbf16>
    %119 = vector.shape_cast %118 : vector<1x1x64x32xbf16> to vector<64x32xbf16>
    %120 = arith.truncf %93 : vector<32x128xf32> to vector<32x128xbf16>
    %cst_58 = arith.constant dense<0.000000e+00> : vector<64x128xf32>
    %121 = tpu.matmul %119, %120, %cst_58 {dimension_numbers = #tpu.dot_dimension_numbers<[1], [0], [0], [1], [0, 0, 1, 1], [], []>} : vector<64x32xbf16>, vector<32x128xbf16>, vector<64x128xf32> -> vector<64x128xf32>
    %122 = arith.addf %117, %121 : vector<64x128xf32>
    %c1_59 = arith.constant 1 : index
    %c2_60 = arith.constant 2 : index
    %c0_61 = arith.constant 0 : index
    %c0_62 = arith.constant 0 : index
    %123 = vector.load %arg5[%c1_59, %c2_60, %c0_61, %c0_62] : memref<3x3x64x32xbf16, #tpu.memory_space<vmem>>, vector<1x1x64x32xbf16>
    %124 = vector.shape_cast %123 : vector<1x1x64x32xbf16> to vector<64x32xbf16>
    %c126_i32 = arith.constant 126 : i32
    %125 = tpu.dynamic_rotate %93 by %c126_i32 dim 1 : vector<32x128xf32>, i32 -> vector<32x128xf32>
    %c2_i32_63 = arith.constant 2 : i32
    %126 = vector.broadcast %c2_i32_63 : i32 to vector<1x128xi32>
    %127 = arith.addi %6, %126 : vector<1x128xi32>
    %c0_i32_64 = arith.constant 0 : i32
    %128 = vector.broadcast %c0_i32_64 : i32 to vector<1x128xi32>
    %129 = arith.cmpi sge, %127, %128 : vector<1x128xi32>
    %c2_i32_65 = arith.constant 2 : i32
    %130 = vector.broadcast %c2_i32_65 : i32 to vector<1x128xi32>
    %131 = arith.addi %6, %130 : vector<1x128xi32>
    %c128_i32_66 = arith.constant 128 : i32
    %132 = vector.broadcast %c128_i32_66 : i32 to vector<1x128xi32>
    %133 = arith.cmpi slt, %131, %132 : vector<1x128xi32>
    %134 = arith.andi %129, %133 : vector<1x128xi1>
    %135 = arith.extui %134 : vector<1x128xi1> to vector<1x128xi32>
    %136 = arith.sitofp %135 : vector<1x128xi32> to vector<1x128xf32>
    %137 = vector.broadcast %136 : vector<1x128xf32> to vector<32x128xf32>
    %138 = arith.mulf %125, %137 : vector<32x128xf32>
    %139 = arith.truncf %138 : vector<32x128xf32> to vector<32x128xbf16>
    %cst_67 = arith.constant dense<0.000000e+00> : vector<64x128xf32>
    %140 = tpu.matmul %124, %139, %cst_67 {dimension_numbers = #tpu.dot_dimension_numbers<[1], [0], [0], [1], [0, 0, 1, 1], [], []>} : vector<64x32xbf16>, vector<32x128xbf16>, vector<64x128xf32> -> vector<64x128xf32>
    %141 = arith.addf %122, %140 : vector<64x128xf32>
    %142 = vector.extract_strided_slice %141 {offsets = [0, 0], sizes = [32, 128], strides = [1, 1]} : vector<64x128xf32> to vector<32x128xf32>
    %143 = math.tanh %142 : vector<32x128xf32>
    %144 = vector.extract_strided_slice %141 {offsets = [32, 0], sizes = [32, 128], strides = [1, 1]} : vector<64x128xf32> to vector<32x128xf32>
    %cst_68 = arith.constant 5.000000e-01 : f32
    %145 = vector.broadcast %cst_68 : f32 to vector<32x128xf32>
    %146 = arith.mulf %145, %144 : vector<32x128xf32>
    %147 = math.tanh %146 : vector<32x128xf32>
    %cst_69 = arith.constant 1.000000e+00 : f32
    %148 = vector.broadcast %cst_69 : f32 to vector<32x128xf32>
    %149 = arith.addf %148, %147 : vector<32x128xf32>
    %cst_70 = arith.constant 5.000000e-01 : f32
    %150 = vector.broadcast %cst_70 : f32 to vector<32x128xf32>
    %151 = arith.mulf %150, %149 : vector<32x128xf32>
    %152 = arith.mulf %143, %151 : vector<32x128xf32>
    %c1_71 = arith.constant 1 : index
    %c0_72 = arith.constant 0 : index
    %c0_73 = arith.constant 0 : index
    %153 = vector.load %arg7[%c1_71, %c0_72, %c0_73] : memref<3x64x32xbf16, #tpu.memory_space<vmem>>, vector<1x64x32xbf16>
    %154 = vector.shape_cast %153 : vector<1x64x32xbf16> to vector<64x32xbf16>
    %155 = arith.truncf %152 : vector<32x128xf32> to vector<32x128xbf16>
    %cst_74 = arith.constant dense<0.000000e+00> : vector<64x128xf32>
    %156 = tpu.matmul %154, %155, %cst_74 {dimension_numbers = #tpu.dot_dimension_numbers<[1], [0], [0], [1], [0, 0, 1, 1], [], []>} : vector<64x32xbf16>, vector<32x128xbf16>, vector<64x128xf32> -> vector<64x128xf32>
    %c1_75 = arith.constant 1 : index
    %c0_76 = arith.constant 0 : index
    %c0_77 = arith.constant 0 : index
    %157 = vector.load %arg8[%c1_75, %c0_76, %c0_77] : memref<3x64x1xf32, #tpu.memory_space<vmem>>, vector<1x64x1xf32>
    %158 = vector.shape_cast %157 : vector<1x64x1xf32> to vector<64x1xf32>
    %159 = vector.broadcast %158 : vector<64x1xf32> to vector<64x128xf32>
    %160 = arith.addf %156, %159 : vector<64x128xf32>
    %161 = vector.extract_strided_slice %160 {offsets = [0, 0], sizes = [32, 128], strides = [1, 1]} : vector<64x128xf32> to vector<32x128xf32>
    %162 = arith.addf %93, %161 : vector<32x128xf32>
    %163 = vector.broadcast %5 : vector<1x128xf32> to vector<32x128xf32>
    %164 = arith.mulf %162, %163 : vector<32x128xf32>
    %165 = vector.extract_strided_slice %160 {offsets = [32, 0], sizes = [32, 128], strides = [1, 1]} : vector<64x128xf32> to vector<32x128xf32>
    %166 = arith.addf %95, %165 : vector<32x128xf32>
    %c2_78 = arith.constant 2 : index
    %c0_79 = arith.constant 0 : index
    %c0_80 = arith.constant 0 : index
    %167 = vector.load %arg6[%c2_78, %c0_79, %c0_80] : memref<3x64x1xf32, #tpu.memory_space<vmem>>, vector<1x64x1xf32>
    %168 = vector.shape_cast %167 : vector<1x64x1xf32> to vector<64x1xf32>
    %c2_81 = arith.constant 2 : index
    %c0_82 = arith.constant 0 : index
    %c0_83 = arith.constant 0 : index
    %c0_84 = arith.constant 0 : index
    %169 = vector.load %arg5[%c2_81, %c0_82, %c0_83, %c0_84] : memref<3x3x64x32xbf16, #tpu.memory_space<vmem>>, vector<1x1x64x32xbf16>
    %170 = vector.shape_cast %169 : vector<1x1x64x32xbf16> to vector<64x32xbf16>
    %c4_i32 = arith.constant 4 : i32
    %171 = tpu.dynamic_rotate %164 by %c4_i32 dim 1 : vector<32x128xf32>, i32 -> vector<32x128xf32>
    %c-4_i32 = arith.constant -4 : i32
    %172 = vector.broadcast %c-4_i32 : i32 to vector<1x128xi32>
    %173 = arith.addi %6, %172 : vector<1x128xi32>
    %c0_i32_85 = arith.constant 0 : i32
    %174 = vector.broadcast %c0_i32_85 : i32 to vector<1x128xi32>
    %175 = arith.cmpi sge, %173, %174 : vector<1x128xi32>
    %c-4_i32_86 = arith.constant -4 : i32
    %176 = vector.broadcast %c-4_i32_86 : i32 to vector<1x128xi32>
    %177 = arith.addi %6, %176 : vector<1x128xi32>
    %c128_i32_87 = arith.constant 128 : i32
    %178 = vector.broadcast %c128_i32_87 : i32 to vector<1x128xi32>
    %179 = arith.cmpi slt, %177, %178 : vector<1x128xi32>
    %180 = arith.andi %175, %179 : vector<1x128xi1>
    %181 = arith.extui %180 : vector<1x128xi1> to vector<1x128xi32>
    %182 = arith.sitofp %181 : vector<1x128xi32> to vector<1x128xf32>
    %183 = vector.broadcast %182 : vector<1x128xf32> to vector<32x128xf32>
    %184 = arith.mulf %171, %183 : vector<32x128xf32>
    %185 = arith.truncf %184 : vector<32x128xf32> to vector<32x128xbf16>
    %cst_88 = arith.constant dense<0.000000e+00> : vector<64x128xf32>
    %186 = tpu.matmul %170, %185, %cst_88 {dimension_numbers = #tpu.dot_dimension_numbers<[1], [0], [0], [1], [0, 0, 1, 1], [], []>} : vector<64x32xbf16>, vector<32x128xbf16>, vector<64x128xf32> -> vector<64x128xf32>
    %187 = vector.broadcast %168 : vector<64x1xf32> to vector<64x128xf32>
    %188 = arith.addf %187, %186 : vector<64x128xf32>
    %c2_89 = arith.constant 2 : index
    %c1_90 = arith.constant 1 : index
    %c0_91 = arith.constant 0 : index
    %c0_92 = arith.constant 0 : index
    %189 = vector.load %arg5[%c2_89, %c1_90, %c0_91, %c0_92] : memref<3x3x64x32xbf16, #tpu.memory_space<vmem>>, vector<1x1x64x32xbf16>
    %190 = vector.shape_cast %189 : vector<1x1x64x32xbf16> to vector<64x32xbf16>
    %191 = arith.truncf %164 : vector<32x128xf32> to vector<32x128xbf16>
    %cst_93 = arith.constant dense<0.000000e+00> : vector<64x128xf32>
    %192 = tpu.matmul %190, %191, %cst_93 {dimension_numbers = #tpu.dot_dimension_numbers<[1], [0], [0], [1], [0, 0, 1, 1], [], []>} : vector<64x32xbf16>, vector<32x128xbf16>, vector<64x128xf32> -> vector<64x128xf32>
    %193 = arith.addf %188, %192 : vector<64x128xf32>
    %c2_94 = arith.constant 2 : index
    %c2_95 = arith.constant 2 : index
    %c0_96 = arith.constant 0 : index
    %c0_97 = arith.constant 0 : index
    %194 = vector.load %arg5[%c2_94, %c2_95, %c0_96, %c0_97] : memref<3x3x64x32xbf16, #tpu.memory_space<vmem>>, vector<1x1x64x32xbf16>
    %195 = vector.shape_cast %194 : vector<1x1x64x32xbf16> to vector<64x32xbf16>
    %c124_i32 = arith.constant 124 : i32
    %196 = tpu.dynamic_rotate %164 by %c124_i32 dim 1 : vector<32x128xf32>, i32 -> vector<32x128xf32>
    %c4_i32_98 = arith.constant 4 : i32
    %197 = vector.broadcast %c4_i32_98 : i32 to vector<1x128xi32>
    %198 = arith.addi %6, %197 : vector<1x128xi32>
    %c0_i32_99 = arith.constant 0 : i32
    %199 = vector.broadcast %c0_i32_99 : i32 to vector<1x128xi32>
    %200 = arith.cmpi sge, %198, %199 : vector<1x128xi32>
    %c4_i32_100 = arith.constant 4 : i32
    %201 = vector.broadcast %c4_i32_100 : i32 to vector<1x128xi32>
    %202 = arith.addi %6, %201 : vector<1x128xi32>
    %c128_i32_101 = arith.constant 128 : i32
    %203 = vector.broadcast %c128_i32_101 : i32 to vector<1x128xi32>
    %204 = arith.cmpi slt, %202, %203 : vector<1x128xi32>
    %205 = arith.andi %200, %204 : vector<1x128xi1>
    %206 = arith.extui %205 : vector<1x128xi1> to vector<1x128xi32>
    %207 = arith.sitofp %206 : vector<1x128xi32> to vector<1x128xf32>
    %208 = vector.broadcast %207 : vector<1x128xf32> to vector<32x128xf32>
    %209 = arith.mulf %196, %208 : vector<32x128xf32>
    %210 = arith.truncf %209 : vector<32x128xf32> to vector<32x128xbf16>
    %cst_102 = arith.constant dense<0.000000e+00> : vector<64x128xf32>
    %211 = tpu.matmul %195, %210, %cst_102 {dimension_numbers = #tpu.dot_dimension_numbers<[1], [0], [0], [1], [0, 0, 1, 1], [], []>} : vector<64x32xbf16>, vector<32x128xbf16>, vector<64x128xf32> -> vector<64x128xf32>
    %212 = arith.addf %193, %211 : vector<64x128xf32>
    %213 = vector.extract_strided_slice %212 {offsets = [0, 0], sizes = [32, 128], strides = [1, 1]} : vector<64x128xf32> to vector<32x128xf32>
    %214 = math.tanh %213 : vector<32x128xf32>
    %215 = vector.extract_strided_slice %212 {offsets = [32, 0], sizes = [32, 128], strides = [1, 1]} : vector<64x128xf32> to vector<32x128xf32>
    %cst_103 = arith.constant 5.000000e-01 : f32
    %216 = vector.broadcast %cst_103 : f32 to vector<32x128xf32>
    %217 = arith.mulf %216, %215 : vector<32x128xf32>
    %218 = math.tanh %217 : vector<32x128xf32>
    %cst_104 = arith.constant 1.000000e+00 : f32
    %219 = vector.broadcast %cst_104 : f32 to vector<32x128xf32>
    %220 = arith.addf %219, %218 : vector<32x128xf32>
    %cst_105 = arith.constant 5.000000e-01 : f32
    %221 = vector.broadcast %cst_105 : f32 to vector<32x128xf32>
    %222 = arith.mulf %221, %220 : vector<32x128xf32>
    %223 = arith.mulf %214, %222 : vector<32x128xf32>
    %c2_106 = arith.constant 2 : index
    %c0_107 = arith.constant 0 : index
    %c0_108 = arith.constant 0 : index
    %224 = vector.load %arg7[%c2_106, %c0_107, %c0_108] : memref<3x64x32xbf16, #tpu.memory_space<vmem>>, vector<1x64x32xbf16>
    %225 = vector.shape_cast %224 : vector<1x64x32xbf16> to vector<64x32xbf16>
    %226 = arith.truncf %223 : vector<32x128xf32> to vector<32x128xbf16>
    %cst_109 = arith.constant dense<0.000000e+00> : vector<64x128xf32>
    %227 = tpu.matmul %225, %226, %cst_109 {dimension_numbers = #tpu.dot_dimension_numbers<[1], [0], [0], [1], [0, 0, 1, 1], [], []>} : vector<64x32xbf16>, vector<32x128xbf16>, vector<64x128xf32> -> vector<64x128xf32>
    %c2_110 = arith.constant 2 : index
    %c0_111 = arith.constant 0 : index
    %c0_112 = arith.constant 0 : index
    %228 = vector.load %arg8[%c2_110, %c0_111, %c0_112] : memref<3x64x1xf32, #tpu.memory_space<vmem>>, vector<1x64x1xf32>
    %229 = vector.shape_cast %228 : vector<1x64x1xf32> to vector<64x1xf32>
    %230 = vector.broadcast %229 : vector<64x1xf32> to vector<64x128xf32>
    %231 = arith.addf %227, %230 : vector<64x128xf32>
    %232 = vector.extract_strided_slice %231 {offsets = [32, 0], sizes = [32, 128], strides = [1, 1]} : vector<64x128xf32> to vector<32x128xf32>
    %233 = arith.addf %166, %232 : vector<32x128xf32>
    %234 = vector.broadcast %5 : vector<1x128xf32> to vector<32x128xf32>
    %235 = arith.mulf %233, %234 : vector<32x128xf32>
    %c0_113 = arith.constant 0 : index
    %c0_114 = arith.constant 0 : index
    %236 = vector.load %arg9[%c0_113, %c0_114] : memref<4x32xbf16, #tpu.memory_space<vmem>>, vector<4x32xbf16>
    %237 = arith.truncf %235 : vector<32x128xf32> to vector<32x128xbf16>
    %cst_115 = arith.constant dense<0.000000e+00> : vector<4x128xf32>
    %238 = tpu.matmul %236, %237, %cst_115 {dimension_numbers = #tpu.dot_dimension_numbers<[1], [0], [0], [1], [0, 0, 1, 1], [], []>} : vector<4x32xbf16>, vector<32x128xbf16>, vector<4x128xf32> -> vector<4x128xf32>
    %c0_116 = arith.constant 0 : index
    %c0_117 = arith.constant 0 : index
    %239 = vector.load %arg10[%c0_116, %c0_117] : memref<4x1xf32, #tpu.memory_space<vmem>>, vector<4x1xf32>
    %240 = vector.broadcast %239 : vector<4x1xf32> to vector<4x128xf32>
    %241 = arith.addf %238, %240 : vector<4x128xf32>
    %242 = vector.broadcast %5 : vector<1x128xf32> to vector<4x128xf32>
    %243 = arith.mulf %241, %242 : vector<4x128xf32>
    %244 = vector.extract_strided_slice %243 {offsets = [0, 0], sizes = [2, 128], strides = [1, 1]} : vector<4x128xf32> to vector<2x128xf32>
    %245 = vector.extract_strided_slice %243 {offsets = [2, 0], sizes = [2, 128], strides = [1, 1]} : vector<4x128xf32> to vector<2x128xf32>
    %246 = math.exp %245 : vector<2x128xf32>
    %247 = arith.mulf %3, %246 : vector<2x128xf32>
    %248 = vector.broadcast %5 : vector<1x128xf32> to vector<2x128xf32>
    %249 = arith.mulf %247, %248 : vector<2x128xf32>
    %250 = arith.addf %244, %249 : vector<2x128xf32>
    %c0_118 = arith.constant 0 : index
    %c0_119 = arith.constant 0 : index
    %c0_120 = arith.constant 0 : index
    %251 = vector.load %arg11[%c0_118, %c0_119, %c0_120] : memref<1x4x128xf32, #tpu.memory_space<vmem>>, vector<1x2x128xf32>
    %252 = vector.shape_cast %251 : vector<1x2x128xf32> to vector<2x128xf32>
    %253 = vector.shape_cast %1 : vector<2x128xf32> to vector<1x2x128xf32>
    tpu.vector_store %arg11[%c0_118, %c0_119, %c0_120], %253 {strides = array<i32>} : memref<1x4x128xf32, #tpu.memory_space<vmem>>, vector<1x2x128xf32>,
    %c0_121 = arith.constant 0 : index
    %c2_122 = arith.constant 2 : index
    %c0_123 = arith.constant 0 : index
    %254 = vector.load %arg11[%c0_121, %c2_122, %c0_123] : memref<1x4x128xf32, #tpu.memory_space<vmem>>, vector<1x2x128xf32>
    %255 = vector.shape_cast %254 : vector<1x2x128xf32> to vector<2x128xf32>
    %256 = vector.shape_cast %250 : vector<2x128xf32> to vector<1x2x128xf32>
    tpu.vector_store %arg11[%c0_121, %c2_122, %c0_123], %256 {strides = array<i32>} : memref<1x4x128xf32, #tpu.memory_space<vmem>>, vector<1x2x128xf32>,
    %cst_124 = arith.constant dense<0.000000e+00> : vector<128xf32>
    %257 = vector.multi_reduction <add>, %245, %cst_124 [0] : vector<2x128xf32> to vector<128xf32>
    %258 = vector.shape_cast %257 : vector<128xf32> to vector<1x128xf32>
    %c0_125 = arith.constant 0 : index
    %c0_126 = arith.constant 0 : index
    %c0_127 = arith.constant 0 : index
    %259 = vector.load %arg12[%c0_125, %c0_126, %c0_127] : memref<1x1x128xf32, #tpu.memory_space<vmem>>, vector<1x1x128xf32>
    %260 = vector.shape_cast %259 : vector<1x1x128xf32> to vector<1x128xf32>
    %261 = vector.shape_cast %258 : vector<1x128xf32> to vector<1x1x128xf32>
    tpu.vector_store %arg12[%c0_125, %c0_126, %c0_127], %261 {strides = array<i32>} : memref<1x1x128xf32, #tpu.memory_space<vmem>>, vector<1x1x128xf32>,
    return
  }
  func.func @transform_0(%arg0: i32) -> (i32, i32, i32) {
    %c0_i32 = arith.constant 0 : i32
    %c0_i32_0 = arith.constant 0 : i32
    %c0_i32_1 = arith.constant 0 : i32
    return %arg0, %c0_i32, %c0_i32_0 : i32, i32, i32
  }
  func.func @transform_1(%arg0: i32) -> (i32, i32, i32) {
    %c0_i32 = arith.constant 0 : i32
    %c0_i32_0 = arith.constant 0 : i32
    %c0_i32_1 = arith.constant 0 : i32
    return %arg0, %c0_i32, %c0_i32_0 : i32, i32, i32
  }
  func.func @transform_2(%arg0: i32) -> (i32, i32) {
    %c0_i32 = arith.constant 0 : i32
    %c0_i32_0 = arith.constant 0 : i32
    %c0_i32_1 = arith.constant 0 : i32
    return %c0_i32, %c0_i32_0 : i32, i32
  }
  func.func @transform_3(%arg0: i32) -> (i32, i32) {
    %c0_i32 = arith.constant 0 : i32
    %c0_i32_0 = arith.constant 0 : i32
    %c0_i32_1 = arith.constant 0 : i32
    return %c0_i32, %c0_i32_0 : i32, i32
  }
  func.func @transform_4(%arg0: i32) -> (i32, i32, i32, i32) {
    %c0_i32 = arith.constant 0 : i32
    %c0_i32_0 = arith.constant 0 : i32
    %c0_i32_1 = arith.constant 0 : i32
    %c0_i32_2 = arith.constant 0 : i32
    %c0_i32_3 = arith.constant 0 : i32
    return %c0_i32, %c0_i32_0, %c0_i32_1, %c0_i32_2 : i32, i32, i32, i32
  }
  func.func @transform_5(%arg0: i32) -> (i32, i32, i32) {
    %c0_i32 = arith.constant 0 : i32
    %c0_i32_0 = arith.constant 0 : i32
    %c0_i32_1 = arith.constant 0 : i32
    %c0_i32_2 = arith.constant 0 : i32
    return %c0_i32, %c0_i32_0, %c0_i32_1 : i32, i32, i32
  }
  func.func @transform_6(%arg0: i32) -> (i32, i32, i32) {
    %c0_i32 = arith.constant 0 : i32
    %c0_i32_0 = arith.constant 0 : i32
    %c0_i32_1 = arith.constant 0 : i32
    %c0_i32_2 = arith.constant 0 : i32
    return %c0_i32, %c0_i32_0, %c0_i32_1 : i32, i32, i32
  }
  func.func @transform_7(%arg0: i32) -> (i32, i32, i32) {
    %c0_i32 = arith.constant 0 : i32
    %c0_i32_0 = arith.constant 0 : i32
    %c0_i32_1 = arith.constant 0 : i32
    %c0_i32_2 = arith.constant 0 : i32
    return %c0_i32, %c0_i32_0, %c0_i32_1 : i32, i32, i32
  }
  func.func @transform_8(%arg0: i32) -> (i32, i32) {
    %c0_i32 = arith.constant 0 : i32
    %c0_i32_0 = arith.constant 0 : i32
    %c0_i32_1 = arith.constant 0 : i32
    return %c0_i32, %c0_i32_0 : i32, i32
  }
  func.func @transform_9(%arg0: i32) -> (i32, i32) {
    %c0_i32 = arith.constant 0 : i32
    %c0_i32_0 = arith.constant 0 : i32
    %c0_i32_1 = arith.constant 0 : i32
    return %c0_i32, %c0_i32_0 : i32, i32
  }
  func.func @transform_10(%arg0: i32) -> (i32, i32, i32) {
    %c0_i32 = arith.constant 0 : i32
    %c0_i32_0 = arith.constant 0 : i32
    %c0_i32_1 = arith.constant 0 : i32
    return %arg0, %c0_i32, %c0_i32_0 : i32, i32, i32
  }
  func.func @transform_11(%arg0: i32) -> (i32, i32, i32) {
    %c0_i32 = arith.constant 0 : i32
    %c0_i32_0 = arith.constant 0 : i32
    %c0_i32_1 = arith.constant 0 : i32
    return %arg0, %c0_i32, %c0_i32_0 : i32, i32, i32
  }
}

</mosaic_0001>

<llo_original>
// kernel: residual_coupling_forward.1
$region0: #{residual_coupling_forward.1}
  #allocation0 [shape = 'u32[]', space=smem, size = 0x4, offset = 0x4, fixed_abs, tag = 'smem constant byte address 0x4 - core index']
  #allocation1 [shape = 'u32[144,128]{1,0:T(1,128)}', space=vmem, size = 0x12000, scoped, tag = 'internal scratch']
  %s0 = inlined_call_operand.vmem [shape: f32[2,4,128], index: 0, kind: input, shape index: {}]
  %s1 = inlined_call_operand.vmem [shape: f32[2,1,128], index: 1, kind: input, shape index: {}]
  %s2 = inlined_call_operand.vmem [shape: f32[32,2], index: 2, kind: input, shape index: {}]
  %s3 = inlined_call_operand.vmem [shape: f32[32,1], index: 3, kind: input, shape index: {}]
  %s4 = inlined_call_operand.vmem [shape: bf16[3,3,64,32], index: 4, kind: input, shape index: {}]
  %s5 = inlined_call_operand.vmem [shape: f32[3,64,1], index: 5, kind: input, shape index: {}]
  %s6 = inlined_call_operand.vmem [shape: bf16[3,64,32], index: 6, kind: input, shape index: {}]
  %s7 = inlined_call_operand.vmem [shape: f32[3,64,1], index: 7, kind: input, shape index: {}]
  %s8 = inlined_call_operand.vmem [shape: bf16[4,32], index: 8, kind: input, shape index: {}]
  %s9 = inlined_call_operand.vmem [shape: f32[4,1], index: 9, kind: input, shape index: {}]
  %s10 = inlined_call_operand.hbm [shape: f32[2,4,128], index: 10, kind: output, shape index: {0}]
  %s11 = inlined_call_operand.vmem [shape: f32[2,1,128], index: 11, kind: output, shape index: {1}]
  %12 = xla_tuple %s10, %s11
  %s13 = sld [smem:[#allocation0]]
  $region81: #{residual_coupling_forward.1} parent=0
    _
  %s15 = ssub.s32 1, %s13
  %s16 = scalar_select 0, %s15, %s13
  $region1: #{residual_coupling_forward.1} parent=0
    #allocation2 [shape = 'u8[4096]{0}', space=vmem, size = 0x1000, scoped, tag = 'output window, operand 0']
    #allocation3 [shape = 's32[2]{0}', space=sflag, size = 0x8, scoped, tag = 'scoped memory for residual_coupling_forward.1']
    %17 = vsyncpa [#allocation3], 0
    %s18 = scalar_lea.sflag [#allocation3], 1
    %19 = vsyncpa %s18, 0
    loop: start=0, step=1, limit=4
    $region2: #{residual_coupling_forward.1} parent=1 // loop_pre_header
      _
    $region3: #{residual_coupling_forward.1} parent=1 // loop_header
      %s21 = sphi 0, %s25
      %p22 = scmp.ge.s32.totalorder %s21, 4
      %s31 = sphi 0, %s33
      %s34 = sphi 0, %s31
      %s35 = sphi 0, %s34
      %s51 = sphi 0, %s35
      %s57 = sphi 0, %s59
      %s60 = sphi 0, %s57
      %s61 = sphi 0, %s60
      %s77 = sphi 0, %s61
      %s81 = sphi 0, %s81
      %s83 = sphi 0, %s81
      %s84 = sphi 0, %s83
      %s98 = sphi 0, %s84
      %s102 = sphi 0, %s102
      %s104 = sphi 0, %s102
      %s105 = sphi 0, %s104
      %s119 = sphi 0, %s105
      %s123 = sphi 0, %s123
      %s125 = sphi 0, %s123
      %s126 = sphi 0, %s125
      %s140 = sphi 0, %s126
      %s144 = sphi 0, %s144
      %s146 = sphi 0, %s144
      %s147 = sphi 0, %s146
      %s161 = sphi 0, %s147
      %s165 = sphi 0, %s165
      %s167 = sphi 0, %s165
      %s168 = sphi 0, %s167
      %s182 = sphi 0, %s168
      %s186 = sphi 0, %s186
      %s188 = sphi 0, %s186
      %s189 = sphi 0, %s188
      %s203 = sphi 0, %s189
      %s207 = sphi 0, %s207
      %s209 = sphi 0, %s207
      %s210 = sphi 0, %s209
      %s224 = sphi 0, %s210
      %s228 = sphi 0, %s228
      %s230 = sphi 0, %s228
      %s231 = sphi 0, %s230
      %s245 = sphi 0, %s231
      %s251 = sphi 0, %s253
      %s254 = sphi 0, %s251
      %s255 = sphi 0, %s254
      %s271 = sphi 0, %s255
      %s277 = sphi 0, %s279
      %s280 = sphi 0, %s277
      %s281 = sphi 0, %s280
      %s297 = sphi 0, %s281
    $region4: #{residual_coupling_forward.1} parent=1 // loop_header_branch
      %24 = sbr.rel (%p22) target = $region8
    $region5: #{residual_coupling_forward.1} parent=1 // loop_body
      %s26 = ssub.s32 %s21, 1
      %s27 = ssub.s32 %s21, 2
      %s28 = sadd.s32 %s21, 1
      %s29 = ssub.s32 %s21, %s28
      %p30 = scmp.eq.s32.totalorder %s29, 0
      %s32 = sadd.s32 %s31, 1
      %s33 = scalar_select %p30, %s31, %s32
      %p36 = pneg %p30
      %p37 = scmp.eq.s32.totalorder %s21, 1
      %p38 = por %p36, %p37
      %p39 = scmp.ne.s32.totalorder %s31, %s34
      %p40 = scmp.eq.s32.totalorder %s21, 0
      %p41 = por %p39, %p40
      %p42 = scmp.ne.s32.totalorder %s31, %s34
      %p43 = scmp.eq.s32.totalorder %s26, 1
      %p44 = por %p42, %p43
      %p45 = scmp.ne.s32.totalorder %s34, %s35
      %p46 = scmp.eq.s32.totalorder %s26, 0
      %p47 = por %p45, %p46
      %p48 = scmp.ne.s32.totalorder %s34, %s35
      %p49 = scmp.eq.s32.totalorder %s27, 1
      %p50 = por %p48, %p49
      %p52 = scmp.ne.s32.totalorder %s35, %s51
      %p53 = scmp.eq.s32.totalorder %s27, 0
      %p54 = por %p52, %p53
      %s55 = ssub.s32 %s21, %s28
      %p56 = scmp.eq.s32.totalorder %s55, 0
      %s58 = sadd.s32 %s57, 1
      %s59 = scalar_select %p56, %s57, %s58
      %p62 = pneg %p56
      %p63 = scmp.eq.s32.totalorder %s21, 1
      %p64 = por %p62, %p63
      %p65 = scmp.ne.s32.totalorder %s57, %s60
      %p66 = scmp.eq.s32.totalorder %s21, 0
      %p67 = por %p65, %p66
      %p68 = scmp.ne.s32.totalorder %s57, %s60
      %p69 = scmp.eq.s32.totalorder %s26, 1
      %p70 = por %p68, %p69
      %p71 = scmp.ne.s32.totalorder %s60, %s61
      %p72 = scmp.eq.s32.totalorder %s26, 0
      %p73 = por %p71, %p72
      %p74 = scmp.ne.s32.totalorder %s60, %s61
      %p75 = scmp.eq.s32.totalorder %s27, 1
      %p76 = por %p74, %p75
      %p78 = scmp.ne.s32.totalorder %s61, %s77
      %p79 = scmp.eq.s32.totalorder %s27, 0
      %p80 = por %p78, %p79
      %s82 = sadd.s32 %s81, 1
      %p85 = scmp.eq.s32.totalorder %s21, 1
      %p86 = scmp.ne.s32.totalorder %s81, %s83
      %p87 = scmp.eq.s32.totalorder %s21, 0
      %p88 = por %p86, %p87
      %p89 = scmp.ne.s32.totalorder %s81, %s83
      %p90 = scmp.eq.s32.totalorder %s26, 1
      %p91 = por %p89, %p90
      %p92 = scmp.ne.s32.totalorder %s83, %s84
      %p93 = scmp.eq.s32.totalorder %s26, 0
      %p94 = por %p92, %p93
      %p95 = scmp.ne.s32.totalorder %s83, %s84
      %p96 = scmp.eq.s32.totalorder %s27, 1
      %p97 = por %p95, %p96
      %p99 = scmp.ne.s32.totalorder %s84, %s98
      %p100 = scmp.eq.s32.totalorder %s27, 0
      %p101 = por %p99, %p100
      %s103 = sadd.s32 %s102, 1
      %p106 = scmp.eq.s32.totalorder %s21, 1
      %p107 = scmp.ne.s32.totalorder %s102, %s104
      %p108 = scmp.eq.s32.totalorder %s21, 0
      %p109 = por %p107, %p108
      %p110 = scmp.ne.s32.totalorder %s102, %s104
      %p111 = scmp.eq.s32.totalorder %s26, 1
      %p112 = por %p110, %p111
      %p113 = scmp.ne.s32.totalorder %s104, %s105
      %p114 = scmp.eq.s32.totalorder %s26, 0
      %p115 = por %p113, %p114
      %p116 = scmp.ne.s32.totalorder %s104, %s105
      %p117 = scmp.eq.s32.totalorder %s27, 1
      %p118 = por %p116, %p117
      %p120 = scmp.ne.s32.totalorder %s105, %s119
      %p121 = scmp.eq.s32.totalorder %s27, 0
      %p122 = por %p120, %p121
      %s124 = sadd.s32 %s123, 1
      %p127 = scmp.eq.s32.totalorder %s21, 1
      %p128 = scmp.ne.s32.totalorder %s123, %s125
      %p129 = scmp.eq.s32.totalorder %s21, 0
      %p130 = por %p128, %p129
      %p131 = scmp.ne.s32.totalorder %s123, %s125
      %p132 = scmp.eq.s32.totalorder %s26, 1
      %p133 = por %p131, %p132
      %p134 = scmp.ne.s32.totalorder %s125, %s126
      %p135 = scmp.eq.s32.totalorder %s26, 0
      %p136 = por %p134, %p135
      %p137 = scmp.ne.s32.totalorder %s125, %s126
      %p138 = scmp.eq.s32.totalorder %s27, 1
      %p139 = por %p137, %p138
      %p141 = scmp.ne.s32.totalorder %s126, %s140
      %p142 = scmp.eq.s32.totalorder %s27, 0
      %p143 = por %p141, %p142
      %s145 = sadd.s32 %s144, 1
      %p148 = scmp.eq.s32.totalorder %s21, 1
      %p149 = scmp.ne.s32.totalorder %s144, %s146
      %p150 = scmp.eq.s32.totalorder %s21, 0
      %p151 = por %p149, %p150
      %p152 = scmp.ne.s32.totalorder %s144, %s146
      %p153 = scmp.eq.s32.totalorder %s26, 1
      %p154 = por %p152, %p153
      %p155 = scmp.ne.s32.totalorder %s146, %s147
      %p156 = scmp.eq.s32.totalorder %s26, 0
      %p157 = por %p155, %p156
      %p158 = scmp.ne.s32.totalorder %s146, %s147
      %p159 = scmp.eq.s32.totalorder %s27, 1
      %p160 = por %p158, %p159
      %p162 = scmp.ne.s32.totalorder %s147, %s161
      %p163 = scmp.eq.s32.totalorder %s27, 0
      %p164 = por %p162, %p163
      %s166 = sadd.s32 %s165, 1
      %p169 = scmp.eq.s32.totalorder %s21, 1
      %p170 = scmp.ne.s32.totalorder %s165, %s167
      %p171 = scmp.eq.s32.totalorder %s21, 0
      %p172 = por %p170, %p171
      %p173 = scmp.ne.s32.totalorder %s165, %s167
      %p174 = scmp.eq.s32.totalorder %s26, 1
      %p175 = por %p173, %p174
      %p176 = scmp.ne.s32.totalorder %s167, %s168
      %p177 = scmp.eq.s32.totalorder %s26, 0
      %p178 = por %p176, %p177
      %p179 = scmp.ne.s32.totalorder %s167, %s168
      %p180 = scmp.eq.s32.totalorder %s27, 1
      %p181 = por %p179, %p180
      %p183 = scmp.ne.s32.totalorder %s168, %s182
      %p184 = scmp.eq.s32.totalorder %s27, 0
      %p185 = por %p183, %p184
      %s187 = sadd.s32 %s186, 1
      %p190 = scmp.eq.s32.totalorder %s21, 1
      %p191 = scmp.ne.s32.totalorder %s186, %s188
      %p192 = scmp.eq.s32.totalorder %s21, 0
      %p193 = por %p191, %p192
      %p194 = scmp.ne.s32.totalorder %s186, %s188
      %p195 = scmp.eq.s32.totalorder %s26, 1
      %p196 = por %p194, %p195
      %p197 = scmp.ne.s32.totalorder %s188, %s189
      %p198 = scmp.eq.s32.totalorder %s26, 0
      %p199 = por %p197, %p198
      %p200 = scmp.ne.s32.totalorder %s188, %s189
      %p201 = scmp.eq.s32.totalorder %s27, 1
      %p202 = por %p200, %p201
      %p204 = scmp.ne.s32.totalorder %s189, %s203
      %p205 = scmp.eq.s32.totalorder %s27, 0
      %p206 = por %p204, %p205
      %s208 = sadd.s32 %s207, 1
      %p211 = scmp.eq.s32.totalorder %s21, 1
      %p212 = scmp.ne.s32.totalorder %s207, %s209
      %p213 = scmp.eq.s32.totalorder %s21, 0
      %p214 = por %p212, %p213
      %p215 = scmp.ne.s32.totalorder %s207, %s209
      %p216 = scmp.eq.s32.totalorder %s26, 1
      %p217 = por %p215, %p216
      %p218 = scmp.ne.s32.totalorder %s209, %s210
      %p219 = scmp.eq.s32.totalorder %s26, 0
      %p220 = por %p218, %p219
      %p221 = scmp.ne.s32.totalorder %s209, %s210
      %p222 = scmp.eq.s32.totalorder %s27, 1
      %p223 = por %p221, %p222
      %p225 = scmp.ne.s32.totalorder %s210, %s224
      %p226 = scmp.eq.s32.totalorder %s27, 0
      %p227 = por %p225, %p226
      %s229 = sadd.s32 %s228, 1
      %p232 = scmp.eq.s32.totalorder %s21, 1
      %p233 = scmp.ne.s32.totalorder %s228, %s230
      %p234 = scmp.eq.s32.totalorder %s21, 0
      %p235 = por %p233, %p234
      %p236 = scmp.ne.s32.totalorder %s228, %s230
      %p237 = scmp.eq.s32.totalorder %s26, 1
      %p238 = por %p236, %p237
      %p239 = scmp.ne.s32.totalorder %s230, %s231
      %p240 = scmp.eq.s32.totalorder %s26, 0
      %p241 = por %p239, %p240
      %p242 = scmp.ne.s32.totalorder %s230, %s231
      %p243 = scmp.eq.s32.totalorder %s27, 1
      %p244 = por %p242, %p243
      %p246 = scmp.ne.s32.totalorder %s231, %s245
      %p247 = scmp.eq.s32.totalorder %s27, 0
      %p248 = por %p246, %p247
      %s249 = ssub.s32 %s21, %s28
      %p250 = scmp.eq.s32.totalorder %s249, 0
      %s252 = sadd.s32 %s251, 1
      %s253 = scalar_select %p250, %s251, %s252
      %p256 = pneg %p250
      %p257 = scmp.eq.s32.totalorder %s21, 1
      %p258 = por %p256, %p257
      %p259 = scmp.ne.s32.totalorder %s251, %s254
      %p260 = scmp.eq.s32.totalorder %s21, 0
      %p261 = por %p259, %p260
      %p262 = scmp.ne.s32.totalorder %s251, %s254
      %p263 = scmp.eq.s32.totalorder %s26, 1
      %p264 = por %p262, %p263
      %p265 = scmp.ne.s32.totalorder %s254, %s255
      %p266 = scmp.eq.s32.totalorder %s26, 0
      %p267 = por %p265, %p266
      %p268 = scmp.ne.s32.totalorder %s254, %s255
      %p269 = scmp.eq.s32.totalorder %s27, 1
      %p270 = por %p268, %p269
      %p272 = scmp.ne.s32.totalorder %s255, %s271
      %p273 = scmp.eq.s32.totalorder %s27, 0
      %p274 = por %p272, %p273
      %s275 = ssub.s32 %s21, %s28
      %p276 = scmp.eq.s32.totalorder %s275, 0
      %s278 = sadd.s32 %s277, 1
      %s279 = scalar_select %p276, %s277, %s278
      %p282 = pneg %p276
      %p283 = scmp.eq.s32.totalorder %s21, 1
      %p284 = por %p282, %p283
      %p285 = scmp.ne.s32.totalorder %s277, %s280
      %p286 = scmp.eq.s32.totalorder %s21, 0
      %p287 = por %p285, %p286
      %p288 = scmp.ne.s32.totalorder %s277, %s280
      %p289 = scmp.eq.s32.totalorder %s26, 1
      %p290 = por %p288, %p289
      %p291 = scmp.ne.s32.totalorder %s280, %s281
      %p292 = scmp.eq.s32.totalorder %s26, 0
      %p293 = por %p291, %p292
      %p294 = scmp.ne.s32.totalorder %s280, %s281
      %p295 = scmp.eq.s32.totalorder %s27, 1
      %p296 = por %p294, %p295
      %p298 = scmp.ne.s32.totalorder %s281, %s297
      %p299 = scmp.eq.s32.totalorder %s27, 0
      %p300 = por %p298, %p299
      %p301 = scmp.le.s32.totalorder 1, %s21
      %p302 = scmp.lt.s32.totalorder %s21, 3
      %p303 = pnand %p301, %p302
      %p304 = pneg %p303
      // Predicated region
      $region9: #{residual_coupling_forward.1} parent=5 // pred_check
        _
      $region10: #{residual_coupling_forward.1} parent=5 // pred_check_branch
        %306 = sbr.rel (%p303) target = $region12
      $region11: #{residual_coupling_forward.1} parent=5 // pred_region
        %s307 = ssub.s32 %s21, 1
        // Predicated region
        $region13: #{residual_coupling_forward.1} parent=11 // pred_check
          %p308 = pneg %p94
        $region14: #{residual_coupling_forward.1} parent=11 // pred_check_branch
          %310 = sbr.rel (%p308) target = $region16
        $region15: #{residual_coupling_forward.1} parent=11 // pred_region
          _
        $region16: #{residual_coupling_forward.1} parent=11 // pred_fallthru
          _
        // Predicated region
        $region17: #{residual_coupling_forward.1} parent=11 // pred_check
          %p311 = pneg %p115
        $region18: #{residual_coupling_forward.1} parent=11 // pred_check_branch
          %313 = sbr.rel (%p311) target = $region20
        $region19: #{residual_coupling_forward.1} parent=11 // pred_region
          _
        $region20: #{residual_coupling_forward.1} parent=11 // pred_fallthru
          _
        // Predicated region
        $region21: #{residual_coupling_forward.1} parent=11 // pred_check
          %p314 = pneg %p136
        $region22: #{residual_coupling_forward.1} parent=11 // pred_check_branch
          %316 = sbr.rel (%p314) target = $region24
        $region23: #{residual_coupling_forward.1} parent=11 // pred_region
          _
        $region24: #{residual_coupling_forward.1} parent=11 // pred_fallthru
          _
        // Predicated region
        $region25: #{residual_coupling_forward.1} parent=11 // pred_check
          %p317 = pneg %p157
        $region26: #{residual_coupling_forward.1} parent=11 // pred_check_branch
          %319 = sbr.rel (%p317) target = $region28
        $region27: #{residual_coupling_forward.1} parent=11 // pred_region
          _
        $region28: #{residual_coupling_forward.1} parent=11 // pred_fallthru
          _
        // Predicated region
        $region29: #{residual_coupling_forward.1} parent=11 // pred_check
          %p320 = pneg %p178
        $region30: #{residual_coupling_forward.1} parent=11 // pred_check_branch
          %322 = sbr.rel (%p320) target = $region32
        $region31: #{residual_coupling_forward.1} parent=11 // pred_region
          _
        $region32: #{residual_coupling_forward.1} parent=11 // pred_fallthru
          _
        // Predicated region
        $region33: #{residual_coupling_forward.1} parent=11 // pred_check
          %p323 = pneg %p199
        $region34: #{residual_coupling_forward.1} parent=11 // pred_check_branch
          %325 = sbr.rel (%p323) target = $region36
        $region35: #{residual_coupling_forward.1} parent=11 // pred_region
          _
        $region36: #{residual_coupling_forward.1} parent=11 // pred_fallthru
          _
        // Predicated region
        $region37: #{residual_coupling_forward.1} parent=11 // pred_check
          %p326 = pneg %p220
        $region38: #{residual_coupling_forward.1} parent=11 // pred_check_branch
          %328 = sbr.rel (%p326) target = $region40
        $region39: #{residual_coupling_forward.1} parent=11 // pred_region
          _
        $region40: #{residual_coupling_forward.1} parent=11 // pred_fallthru
          _
        // Predicated region
        $region41: #{residual_coupling_forward.1} parent=11 // pred_check
          %p329 = pneg %p241
        $region42: #{residual_coupling_forward.1} parent=11 // pred_check_branch
          %331 = sbr.rel (%p329) target = $region44
        $region43: #{residual_coupling_forward.1} parent=11 // pred_region
          _
        $region44: #{residual_coupling_forward.1} parent=11 // pred_fallthru
          _
      $region12: #{residual_coupling_forward.1} parent=5 // pred_fallthru
        _
      %p332 = scmp.lt.s32.totalorder %s21, 2
      // Predicated region
      $region45: #{residual_coupling_forward.1} parent=5 // pred_check
        %p333 = pneg %p332
      $region46: #{residual_coupling_forward.1} parent=5 // pred_check_branch
        %335 = sbr.rel (%p333) target = $region48
      $region47: #{residual_coupling_forward.1} parent=5 // pred_region
        // Predicated region
        $region49: #{residual_coupling_forward.1} parent=47 // pred_check
          %p336 = pneg %p41
        $region50: #{residual_coupling_forward.1} parent=47 // pred_check_branch
          %338 = sbr.rel (%p336) target = $region52
        $region51: #{residual_coupling_forward.1} parent=47 // pred_region
          %p339 = scmp.lt.s32.totalorder %s21, 1
          %s340 = scalar_select %p339, %s21, 1
          %s341 = smul.addr %s340, 4
          %s342 = scalar_lea.vmem %s0, %s341
        $region52: #{residual_coupling_forward.1} parent=47 // pred_fallthru
          _
        // Predicated region
        $region53: #{residual_coupling_forward.1} parent=47 // pred_check
          %p343 = pneg %p67
        $region54: #{residual_coupling_forward.1} parent=47 // pred_check_branch
          %345 = sbr.rel (%p343) target = $region56
        $region55: #{residual_coupling_forward.1} parent=47 // pred_region
          %p346 = scmp.lt.s32.totalorder %s21, 1
          %s347 = scalar_select %p346, %s21, 1
          %s348 = scalar_lea.vmem %s1, %s347
        $region56: #{residual_coupling_forward.1} parent=47 // pred_fallthru
          _
      $region48: #{residual_coupling_forward.1} parent=5 // pred_fallthru
        _
      %p349 = scmp.le.s32.totalorder 1, %s21
      %p350 = scmp.lt.s32.totalorder %s21, 3
      %p351 = pnand %p349, %p350
      %p352 = pneg %p351
      // Predicated region
      $region57: #{residual_coupling_forward.1} parent=5 // pred_check
        _
      $region58: #{residual_coupling_forward.1} parent=5 // pred_check_branch
        %354 = sbr.rel (%p351) target = $region60
      $region59: #{residual_coupling_forward.1} parent=5 // pred_region
        %s355 = ssub.s32 %s21, 1
        %p356 = scmp.lt.s32.totalorder %s26, 1
        %s357 = scalar_select %p356, %s26, 1
        %s358 = smul.addr %s357, 4
        %s359 = scalar_lea.vmem %s0, %s358
        %p360 = pneg %p47
        %p361 = pneg %p44
        %p362 = scmp.lt.s32.totalorder %s26, 1
        %s363 = scalar_select %p362, %s26, 1
        %s364 = scalar_lea.vmem %s1, %s363
        %p365 = pneg %p73
        %p366 = pneg %p70
        %p367 = pneg %p94
        %p368 = pneg %p91
        %p369 = pneg %p115
        %p370 = pneg %p112
        %p371 = pneg %p136
        %p372 = pneg %p133
        %p373 = pneg %p157
        %p374 = pneg %p154
        %p375 = pneg %p178
        %p376 = pneg %p175
        %p377 = pneg %p199
        %p378 = pneg %p196
        %p379 = pneg %p220
        %p380 = pneg %p217
        %p381 = pneg %p241
        %p382 = pneg %p238
        %p383 = pneg %p267
        %p384 = pneg %p264
        %s385 = sand.u32 %s254, 1
        %s386 = scalar_lea.sflag [#allocation3], %s385
        %s387 = sand.u32 %s254, 1
        %s388 = smul.addr %s387, 4
        %s389 = scalar_lea.vmem [#allocation2], %s388
        %p390 = pneg %p293
        %p391 = pneg %p290
        %p392 = scmp.lt.s32.totalorder %s26, 1
        %s393 = scalar_select %p392, %s26, 1
        %s394 = scalar_lea.vmem %s11, %s393
        %p395 = scmp.lt.s32.totalorder %s26, 1
        %s396 = scalar_select %p395, %s26, 1
        %s397 = smul.addr %s396, 4
        %s398 = scalar_lea.vmem %s0, %s397
        %p399 = scmp.lt.s32.totalorder %s26, 1
        %s400 = scalar_select %p399, %s26, 1
        %s401 = scalar_lea.vmem %s1, %s400
        %p402 = scmp.lt.s32.totalorder %s26, 1
        %s403 = scalar_select %p402, %s26, 1
        %s404 = scalar_lea.vmem %s11, %s403
        %v406 = vld [vmem:[%s398] sm:$0x3]
        %v407 = vld [vmem:[%s398 + $0x2] sm:$0x3]
        %v408 = vld [vmem:[%s401] sm:$0x1]
        %v409 = vlaneseq
        %v410 = vand.u32 %v409, 127
        %v411 = vld [vmem:[%s2] sm:$0xff]
        %v412 = vld [vmem:[%s2 + $0x8] sm:$0xff]
        %v413 = vld [vmem:[%s2 + $0x10] sm:$0xff]
        %v414 = vld [vmem:[%s2 + $0x18] sm:$0xff]
        %v415 = vld [vmem:[%s3] sm:$0xff]
        %v416 = vld [vmem:[%s3 + $0x8] sm:$0xff]
        %v417 = vld [vmem:[%s3 + $0x10] sm:$0xff]
        %v418 = vld [vmem:[%s3 + $0x18] sm:$0xff]
        %420 = vset.pattern.permute.xlu0 0
        %421 = vperm.xlu0 %420, %v411
        %v422 = vpop.permute.xlu0 %421
        %425 = vset.pattern.permute.xlu0 0
        %426 = vperm.xlu0 %425, %v412
        %v427 = vpop.permute.xlu0 %426
        %430 = vset.pattern.permute.xlu0 0
        %431 = vperm.xlu0 %430, %v413
        %v432 = vpop.permute.xlu0 %431
        %435 = vset.pattern.permute.xlu0 0
        %436 = vperm.xlu0 %435, %v414
        %v437 = vpop.permute.xlu0 %436
        %v439 = vlaneseq
        %v440 = vshrl.u32 %v439, 7
        %v441 = vsub.s32 0, %v440
        %v442 = vrot.slane %v406, %v441
        %v443 = vmul.f32 %v422, %v442
        %v444 = vmul.f32 %v427, %v442
        %v445 = vmul.f32 %v432, %v442
        %v446 = vmul.f32 %v437, %v442
        %448 = vset.pattern.permute.xlu0 0
        %449 = vperm.xlu0 %448, %v415
        %v450 = vpop.permute.xlu0 %449
        %453 = vset.pattern.permute.xlu0 0
        %454 = vperm.xlu0 %453, %v416
        %v455 = vpop.permute.xlu0 %454
        %458 = vset.pattern.permute.xlu0 0
        %459 = vperm.xlu0 %458, %v417
        %v460 = vpop.permute.xlu0 %459
        %463 = vset.pattern.permute.xlu0 0
        %464 = vperm.xlu0 %463, %v418
        %v465 = vpop.permute.xlu0 %464
        %v467 = vadd.f32 %v450, %v443
        %v468 = vadd.f32 %v455, %v444
        %v469 = vadd.f32 %v460, %v445
        %v470 = vadd.f32 %v465, %v446
        %471 = vset.pattern.permute.xlu0 1
        %472 = vperm.xlu0 %471, %v411
        %v473 = vpop.permute.xlu0 %472
        %475 = vset.pattern.permute.xlu0 1
        %476 = vperm.xlu0 %475, %v412
        %v477 = vpop.permute.xlu0 %476
        %479 = vset.pattern.permute.xlu0 1
        %480 = vperm.xlu0 %479, %v413
        %v481 = vpop.permute.xlu0 %480
        %483 = vset.pattern.permute.xlu0 1
        %484 = vperm.xlu0 %483, %v414
        %v485 = vpop.permute.xlu0 %484
        %v487 = vlaneseq
        %v488 = vshrl.u32 %v487, 7
        %v489 = vsub.s32 1, %v488
        %v490 = vrot.slane %v406, %v489
        %v491 = vmul.f32 %v473, %v490
        %v492 = vmul.f32 %v477, %v490
        %v493 = vmul.f32 %v481, %v490
        %v494 = vmul.f32 %v485, %v490
        %v495 = vadd.f32 %v467, %v491
        %v496 = vadd.f32 %v468, %v492
        %v497 = vadd.f32 %v469, %v493
        %v498 = vadd.f32 %v470, %v494
        %v500 = vlaneseq
        %v501 = vshrl.u32 %v500, 7
        %v502 = vsub.s32 0, %v501
        %v503 = vrot.slane %v408, %v502
        %v505 = vmul.f32 %v495, %v503
        %v506 = vmul.f32 %v496, %v503
        %v507 = vmul.f32 %v497, %v503
        %v508 = vmul.f32 %v498, %v503
        %v509 = vld [vmem:[%s5] sm:$0xff]
        %v510 = vld [vmem:[%s5 + $0x8] sm:$0xff]
        %v511 = vld [vmem:[%s5 + $0x10] sm:$0xff]
        %v512 = vld [vmem:[%s5 + $0x18] sm:$0xff]
        %v513 = vld [vmem:[%s5 + $0x20] sm:$0xff]
        %v514 = vld [vmem:[%s5 + $0x28] sm:$0xff]
        %v515 = vld [vmem:[%s5 + $0x30] sm:$0xff]
        %v516 = vld [vmem:[%s5 + $0x38] sm:$0xff]
        %v517 = vld [vmem:[%s4] sm:$0xf]
        %v518 = vld [vmem:[%s4 + $0x4] sm:$0xf]
        %v519 = vld [vmem:[%s4 + $0x8] sm:$0xf]
        %v520 = vld [vmem:[%s4 + $0xc] sm:$0xf]
        %v521 = vld [vmem:[%s4 + $0x10] sm:$0xf]
        %v522 = vld [vmem:[%s4 + $0x14] sm:$0xf]
        %v523 = vld [vmem:[%s4 + $0x18] sm:$0xf]
        %v524 = vld [vmem:[%s4 + $0x1c] sm:$0xf]
        %525 = vrot.lane.b32.xlu0 %v505, 1
        %v526 = vpop.permute.xlu0 %525
        %527 = vrot.lane.b32.xlu0 %v506, 1
        %v528 = vpop.permute.xlu0 %527
        %529 = vrot.lane.b32.xlu0 %v507, 1
        %v530 = vpop.permute.xlu0 %529
        %531 = vrot.lane.b32.xlu0 %v508, 1
        %v532 = vpop.permute.xlu0 %531
        %v533 = vadd.s32 %v410, 4294967295
        %vm534 = vcmp.ge.s32.totalorder %v533, 0
        %vm535 = vcmp.lt.s32.totalorder %v533, 128
        %vm536 = vmand %vm534, %vm535
        %v537 = vsel %vm536, 1, 0
        %v538 = vcvt.s32.f32 %v537
        %v539 = vmul.f32 %v526, %v538
        %v540 = vmul.f32 %v528, %v538
        %v541 = vmul.f32 %v530, %v538
        %v542 = vmul.f32 %v532, %v538
        %v543 = vpack.c.bf16 %v540, %v539
        %v544 = vpack.c.bf16 %v542, %v541
        %v553 = vunpack.c.l.b16 %v517
        %v554 = vunpack.c.l.b16 %v518
        %v555 = vunpack.c.l.b16 %v519
        %v556 = vunpack.c.l.b16 %v520
        %v557 = vunpack.c.l.b16 %v521
        %v558 = vunpack.c.l.b16 %v522
        %v559 = vunpack.c.l.b16 %v523
        %v560 = vunpack.c.l.b16 %v524
        %v561 = vpack.c.b16 %v554, %v553
        %v562 = vpack.c.b16 %v556, %v555
        %v563 = vpack.c.b16 %v558, %v557
        %v564 = vpack.c.b16 %v560, %v559
        %vm565 = vcmask 261120
        %v567 = vsel %vm565, %v561, 0
        %v570 = vsel %vm565, %v562, 0
        %v573 = vsel %vm565, %v563, 0
        %v576 = vsel %vm565, %v564, 0
        %578 = vmatprep.subr.bf16.mxu0 0
        %579 = vmatpush1.bf16.msra.mxu0 0
        %580 = vmatprep.subr.bf16.mxu0 0
        %581 = vmatpush1.bf16.msra.mxu0 0
        %582 = vmatprep.subr.bf16.mxu0 0
        %583 = vmatpush1.bf16.msra.mxu0 0
        %584 = vmatprep.subr.bf16.mxu0 0
        %585 = vmatpush1.bf16.msra.mxu0 0
        %586 = vmatprep.subr.bf16.mxu0 0
        %587 = vmatpush1.bf16.msra.mxu0 0
        %588 = vmatprep.subr.bf16.mxu0 0
        %589 = vmatpush1.bf16.msra.mxu0 0
        %590 = vmatprep.subr.bf16.mxu0 0
        %591 = vmatpush1.bf16.msra.mxu0 %v544
        %592 = vmatprep.subr.bf16.mxu0 0
        %593 = vmatpush1.bf16.msra.mxu0 %v543
        %594 = vmatprep.subr.bf16.mxu0 0
        %595 = vmatpush2.bf16.msra.mxu0 0
        %596 = vmatprep.subr.bf16.mxu0 0
        %597 = vmatpush2.bf16.msra.mxu0 0
        %598 = vmatprep.subr.bf16.mxu0 0
        %599 = vmatpush2.bf16.msra.mxu0 0
        %600 = vmatprep.subr.bf16.mxu0 0
        %601 = vmatpush2.bf16.msra.mxu0 0
        %602 = vmatprep.subr.bf16.mxu0 0
        %603 = vmatpush2.bf16.msra.mxu0 0
        %604 = vmatprep.subr.bf16.mxu0 0
        %605 = vmatpush2.bf16.msra.mxu0 0
        %606 = vmatprep.subr.bf16.mxu0 0
        %607 = vmatpush2.bf16.msra.mxu0 0
        %608 = vmatprep.subr.bf16.mxu0 0
        %609 = vmatpush2.bf16.msra.mxu0 0
        %610 = vmatprep.mubr.bf16.mxu0 0
        %611 = vmatmul.mubr.bf16.gmra.mxu0 %v567
        %v612 = vpop.f32.mrf.mxu0
        %v613 = vadd.f32 0.0, %v612
        %v614 = vpop.f32.mrf.mxu0
        %v615 = vpop.f32.mrf.mxu0
        %v616 = vadd.f32 0.0, %v615
        %v617 = vpop.f32.mrf.mxu0
        %618 = vmatprep.mubr.bf16.mxu0 0
        %619 = vmatmul.mubr.bf16.gmra.mxu0 %v570
        %v620 = vpop.f32.mrf.mxu0
        %v621 = vadd.f32 0.0, %v620
        %v622 = vpop.f32.mrf.mxu0
        %v623 = vpop.f32.mrf.mxu0
        %v624 = vadd.f32 0.0, %v623
        %v625 = vpop.f32.mrf.mxu0
        %626 = vmatprep.mubr.bf16.mxu0 0
        %627 = vmatmul.mubr.bf16.gmra.mxu0 %v573
        %v628 = vpop.f32.mrf.mxu0
        %v629 = vadd.f32 0.0, %v628
        %v630 = vpop.f32.mrf.mxu0
        %v631 = vpop.f32.mrf.mxu0
        %v632 = vadd.f32 0.0, %v631
        %v633 = vpop.f32.mrf.mxu0
        %634 = vmatprep.mubr.bf16.mxu0 0
        %635 = vmatmul.mubr.bf16.gmra.mxu0 %v576
        %v636 = vpop.f32.mrf.mxu0
        %v637 = vadd.f32 0.0, %v636
        %v638 = vpop.f32.mrf.mxu0
        %v639 = vpop.f32.mrf.mxu0
        %v640 = vadd.f32 0.0, %v639
        %v641 = vpop.f32.mrf.mxu0
        %642 = vdwg.mxu0
        %644 = vset.pattern.permute.xlu0 0
        %645 = vperm.xlu0 %644, %v509
        %v646 = vpop.permute.xlu0 %645
        %649 = vset.pattern.permute.xlu0 0
        %650 = vperm.xlu0 %649, %v510
        %v651 = vpop.permute.xlu0 %650
        %654 = vset.pattern.permute.xlu0 0
        %655 = vperm.xlu0 %654, %v511
        %v656 = vpop.permute.xlu0 %655
        %659 = vset.pattern.permute.xlu0 0
        %660 = vperm.xlu0 %659, %v512
        %v661 = vpop.permute.xlu0 %660
        %664 = vset.pattern.permute.xlu0 0
        %665 = vperm.xlu0 %664, %v513
        %v666 = vpop.permute.xlu0 %665
        %669 = vset.pattern.permute.xlu0 0
        %670 = vperm.xlu0 %669, %v514
        %v671 = vpop.permute.xlu0 %670
        %674 = vset.pattern.permute.xlu0 0
        %675 = vperm.xlu0 %674, %v515
        %v676 = vpop.permute.xlu0 %675
        %679 = vset.pattern.permute.xlu0 0
        %680 = vperm.xlu0 %679, %v516
        %v681 = vpop.permute.xlu0 %680
        %v683 = vadd.f32 %v646, %v613
        %v684 = vadd.f32 %v651, %v616
        %v685 = vadd.f32 %v656, %v621
        %v686 = vadd.f32 %v661, %v624
        %v687 = vadd.f32 %v666, %v629
        %v688 = vadd.f32 %v671, %v632
        %v689 = vadd.f32 %v676, %v637
        %v690 = vadd.f32 %v681, %v640
        %s691 = scalar_lea.vmem %s4, 32
        %v692 = vld [vmem:[%s691] sm:$0xf]
        %v693 = vld [vmem:[%s691 + $0x4] sm:$0xf]
        %v694 = vld [vmem:[%s691 + $0x8] sm:$0xf]
        %v695 = vld [vmem:[%s691 + $0xc] sm:$0xf]
        %v696 = vld [vmem:[%s691 + $0x10] sm:$0xf]
        %v697 = vld [vmem:[%s691 + $0x14] sm:$0xf]
        %v698 = vld [vmem:[%s691 + $0x18] sm:$0xf]
        %v699 = vld [vmem:[%s691 + $0x1c] sm:$0xf]
        %v700 = vpack.c.bf16 %v506, %v505
        %v701 = vpack.c.bf16 %v508, %v507
        %v710 = vunpack.c.l.b16 %v692
        %v711 = vunpack.c.l.b16 %v693
        %v712 = vunpack.c.l.b16 %v694
        %v713 = vunpack.c.l.b16 %v695
        %v714 = vunpack.c.l.b16 %v696
        %v715 = vunpack.c.l.b16 %v697
        %v716 = vunpack.c.l.b16 %v698
        %v717 = vunpack.c.l.b16 %v699
        %v718 = vpack.c.b16 %v711, %v710
        %v719 = vpack.c.b16 %v713, %v712
        %v720 = vpack.c.b16 %v715, %v714
        %v721 = vpack.c.b16 %v717, %v716
        %v723 = vsel %vm565, %v718, 0
        %v726 = vsel %vm565, %v719, 0
        %v729 = vsel %vm565, %v720, 0
        %v732 = vsel %vm565, %v721, 0
        %734 = vmatprep.subr.bf16.mxu0 0
        %735 = vmatpush1.bf16.msra.mxu0 0
        %736 = vmatprep.subr.bf16.mxu0 0
        %737 = vmatpush1.bf16.msra.mxu0 0
        %738 = vmatprep.subr.bf16.mxu0 0
        %739 = vmatpush1.bf16.msra.mxu0 0
        %740 = vmatprep.subr.bf16.mxu0 0
        %741 = vmatpush1.bf16.msra.mxu0 0
        %742 = vmatprep.subr.bf16.mxu0 0
        %743 = vmatpush1.bf16.msra.mxu0 0
        %744 = vmatprep.subr.bf16.mxu0 0
        %745 = vmatpush1.bf16.msra.mxu0 0
        %746 = vmatprep.subr.bf16.mxu0 0
        %747 = vmatpush1.bf16.msra.mxu0 %v701
        %748 = vmatprep.subr.bf16.mxu0 0
        %749 = vmatpush1.bf16.msra.mxu0 %v700
        %750 = vmatprep.subr.bf16.mxu0 0
        %751 = vmatpush2.bf16.msra.mxu0 0
        %752 = vmatprep.subr.bf16.mxu0 0
        %753 = vmatpush2.bf16.msra.mxu0 0
        %754 = vmatprep.subr.bf16.mxu0 0
        %755 = vmatpush2.bf16.msra.mxu0 0
        %756 = vmatprep.subr.bf16.mxu0 0
        %757 = vmatpush2.bf16.msra.mxu0 0
        %758 = vmatprep.subr.bf16.mxu0 0
        %759 = vmatpush2.bf16.msra.mxu0 0
        %760 = vmatprep.subr.bf16.mxu0 0
        %761 = vmatpush2.bf16.msra.mxu0 0
        %762 = vmatprep.subr.bf16.mxu0 0
        %763 = vmatpush2.bf16.msra.mxu0 0
        %764 = vmatprep.subr.bf16.mxu0 0
        %765 = vmatpush2.bf16.msra.mxu0 0
        %766 = vmatprep.mubr.bf16.mxu0 0
        %767 = vmatmul.mubr.bf16.gmra.mxu0 %v723
        %v768 = vpop.f32.mrf.mxu0
        %v769 = vadd.f32 0.0, %v768
        %v770 = vpop.f32.mrf.mxu0
        %v771 = vpop.f32.mrf.mxu0
        %v772 = vadd.f32 0.0, %v771
        %v773 = vpop.f32.mrf.mxu0
        %774 = vmatprep.mubr.bf16.mxu0 0
        %775 = vmatmul.mubr.bf16.gmra.mxu0 %v726
        %v776 = vpop.f32.mrf.mxu0
        %v777 = vadd.f32 0.0, %v776
        %v778 = vpop.f32.mrf.mxu0
        %v779 = vpop.f32.mrf.mxu0
        %v780 = vadd.f32 0.0, %v779
        %v781 = vpop.f32.mrf.mxu0
        %782 = vmatprep.mubr.bf16.mxu0 0
        %783 = vmatmul.mubr.bf16.gmra.mxu0 %v729
        %v784 = vpop.f32.mrf.mxu0
        %v785 = vadd.f32 0.0, %v784
        %v786 = vpop.f32.mrf.mxu0
        %v787 = vpop.f32.mrf.mxu0
        %v788 = vadd.f32 0.0, %v787
        %v789 = vpop.f32.mrf.mxu0
        %790 = vmatprep.mubr.bf16.mxu0 0
        %791 = vmatmul.mubr.bf16.gmra.mxu0 %v732
        %v792 = vpop.f32.mrf.mxu0
        %v793 = vadd.f32 0.0, %v792
        %v794 = vpop.f32.mrf.mxu0
        %v795 = vpop.f32.mrf.mxu0
        %v796 = vadd.f32 0.0, %v795
        %v797 = vpop.f32.mrf.mxu0
        %798 = vdwg.mxu0
        %v799 = vadd.f32 %v683, %v769
        %v800 = vadd.f32 %v684, %v772
        %v801 = vadd.f32 %v685, %v777
        %v802 = vadd.f32 %v686, %v780
        %v803 = vadd.f32 %v687, %v785
        %v804 = vadd.f32 %v688, %v788
        %v805 = vadd.f32 %v689, %v793
        %v806 = vadd.f32 %v690, %v796
        %s807 = scalar_lea.vmem %s4, 64
        %v808 = vld [vmem:[%s807] sm:$0xf]
        %v809 = vld [vmem:[%s807 + $0x4] sm:$0xf]
        %v810 = vld [vmem:[%s807 + $0x8] sm:$0xf]
        %v811 = vld [vmem:[%s807 + $0xc] sm:$0xf]
        %v812 = vld [vmem:[%s807 + $0x10] sm:$0xf]
        %v813 = vld [vmem:[%s807 + $0x14] sm:$0xf]
        %v814 = vld [vmem:[%s807 + $0x18] sm:$0xf]
        %v815 = vld [vmem:[%s807 + $0x1c] sm:$0xf]
        %816 = vrot.lane.b32.xlu0 %v505, 127
        %v817 = vpop.permute.xlu0 %816
        %818 = vrot.lane.b32.xlu0 %v506, 127
        %v819 = vpop.permute.xlu0 %818
        %820 = vrot.lane.b32.xlu0 %v507, 127
        %v821 = vpop.permute.xlu0 %820
        %822 = vrot.lane.b32.xlu0 %v508, 127
        %v823 = vpop.permute.xlu0 %822
        %v824 = vadd.s32 %v410, 1
        %vm825 = vcmp.ge.s32.totalorder %v824, 0
        %vm826 = vcmp.lt.s32.totalorder %v824, 128
        %vm827 = vmand %vm825, %vm826
        %v828 = vsel %vm827, 1, 0
        %v829 = vcvt.s32.f32 %v828
        %v830 = vmul.f32 %v817, %v829
        %v831 = vmul.f32 %v819, %v829
        %v832 = vmul.f32 %v821, %v829
        %v833 = vmul.f32 %v823, %v829
        %v834 = vpack.c.bf16 %v831, %v830
        %v835 = vpack.c.bf16 %v833, %v832
        %v844 = vunpack.c.l.b16 %v808
        %v845 = vunpack.c.l.b16 %v809
        %v846 = vunpack.c.l.b16 %v810
        %v847 = vunpack.c.l.b16 %v811
        %v848 = vunpack.c.l.b16 %v812
        %v849 = vunpack.c.l.b16 %v813
        %v850 = vunpack.c.l.b16 %v814
        %v851 = vunpack.c.l.b16 %v815
        %v852 = vpack.c.b16 %v845, %v844
        %v853 = vpack.c.b16 %v847, %v846
        %v854 = vpack.c.b16 %v849, %v848
        %v855 = vpack.c.b16 %v851, %v850
        %v857 = vsel %vm565, %v852, 0
        %v860 = vsel %vm565, %v853, 0
        %v863 = vsel %vm565, %v854, 0
        %v866 = vsel %vm565, %v855, 0
        %868 = vmatprep.subr.bf16.mxu0 0
        %869 = vmatpush1.bf16.msra.mxu0 0
        %870 = vmatprep.subr.bf16.mxu0 0
        %871 = vmatpush1.bf16.msra.mxu0 0
        %872 = vmatprep.subr.bf16.mxu0 0
        %873 = vmatpush1.bf16.msra.mxu0 0
        %874 = vmatprep.subr.bf16.mxu0 0
        %875 = vmatpush1.bf16.msra.mxu0 0
        %876 = vmatprep.subr.bf16.mxu0 0
        %877 = vmatpush1.bf16.msra.mxu0 0
        %878 = vmatprep.subr.bf16.mxu0 0
        %879 = vmatpush1.bf16.msra.mxu0 0
        %880 = vmatprep.subr.bf16.mxu0 0
        %881 = vmatpush1.bf16.msra.mxu0 %v835
        %882 = vmatprep.subr.bf16.mxu0 0
        %883 = vmatpush1.bf16.msra.mxu0 %v834
        %884 = vmatprep.subr.bf16.mxu0 0
        %885 = vmatpush2.bf16.msra.mxu0 0
        %886 = vmatprep.subr.bf16.mxu0 0
        %887 = vmatpush2.bf16.msra.mxu0 0
        %888 = vmatprep.subr.bf16.mxu0 0
        %889 = vmatpush2.bf16.msra.mxu0 0
        %890 = vmatprep.subr.bf16.mxu0 0
        %891 = vmatpush2.bf16.msra.mxu0 0
        %892 = vmatprep.subr.bf16.mxu0 0
        %893 = vmatpush2.bf16.msra.mxu0 0
        %894 = vmatprep.subr.bf16.mxu0 0
        %895 = vmatpush2.bf16.msra.mxu0 0
        %896 = vmatprep.subr.bf16.mxu0 0
        %897 = vmatpush2.bf16.msra.mxu0 0
        %898 = vmatprep.subr.bf16.mxu0 0
        %899 = vmatpush2.bf16.msra.mxu0 0
        %900 = vmatprep.mubr.bf16.mxu0 0
        %901 = vmatmul.mubr.bf16.gmra.mxu0 %v857
        %v902 = vpop.f32.mrf.mxu0
        %v903 = vadd.f32 0.0, %v902
        %v904 = vpop.f32.mrf.mxu0
        %v905 = vpop.f32.mrf.mxu0
        %v906 = vadd.f32 0.0, %v905
        %v907 = vpop.f32.mrf.mxu0
        %908 = vmatprep.mubr.bf16.mxu0 0
        %909 = vmatmul.mubr.bf16.gmra.mxu0 %v860
        %v910 = vpop.f32.mrf.mxu0
        %v911 = vadd.f32 0.0, %v910
        %v912 = vpop.f32.mrf.mxu0
        %v913 = vpop.f32.mrf.mxu0
        %v914 = vadd.f32 0.0, %v913
        %v915 = vpop.f32.mrf.mxu0
        %916 = vmatprep.mubr.bf16.mxu0 0
        %917 = vmatmul.mubr.bf16.gmra.mxu0 %v863
        %v918 = vpop.f32.mrf.mxu0
        %v919 = vadd.f32 0.0, %v918
        %v920 = vpop.f32.mrf.mxu0
        %v921 = vpop.f32.mrf.mxu0
        %v922 = vadd.f32 0.0, %v921
        %v923 = vpop.f32.mrf.mxu0
        %924 = vmatprep.mubr.bf16.mxu0 0
        %925 = vmatmul.mubr.bf16.gmra.mxu0 %v866
        %v926 = vpop.f32.mrf.mxu0
        %v927 = vadd.f32 0.0, %v926
        %v928 = vpop.f32.mrf.mxu0
        %v929 = vpop.f32.mrf.mxu0
        %v930 = vadd.f32 0.0, %v929
        %v931 = vpop.f32.mrf.mxu0
        %932 = vdwg.mxu0
        %v933 = vadd.f32 %v799, %v903
        %v934 = vadd.f32 %v800, %v906
        %v935 = vadd.f32 %v801, %v911
        %v936 = vadd.f32 %v802, %v914
        %v937 = vadd.f32 %v803, %v919
        %v938 = vadd.f32 %v804, %v922
        %v939 = vadd.f32 %v805, %v927
        %v940 = vadd.f32 %v806, %v930
        %v941 = vtanh.pop %v933
        %v942 = vtanh.pop %v934
        %v943 = vtanh.pop %v935
        %v944 = vtanh.pop %v936
        %v945 = vmul.f32 %v937, 0.5
        %v946 = vmul.f32 %v938, 0.5
        %v947 = vmul.f32 %v939, 0.5
        %v948 = vmul.f32 %v940, 0.5
        %v949 = vtanh.pop %v945
        %v950 = vtanh.pop %v946
        %v951 = vtanh.pop %v947
        %v952 = vtanh.pop %v948
        %v953 = vadd.f32 %v949, 1.0
        %v954 = vadd.f32 %v950, 1.0
        %v955 = vadd.f32 %v951, 1.0
        %v956 = vadd.f32 %v952, 1.0
        %v957 = vmul.f32 %v953, 0.5
        %v958 = vmul.f32 %v954, 0.5
        %v959 = vmul.f32 %v955, 0.5
        %v960 = vmul.f32 %v956, 0.5
        %v961 = vmul.f32 %v941, %v957
        %v962 = vmul.f32 %v942, %v958
        %v963 = vmul.f32 %v943, %v959
        %v964 = vmul.f32 %v944, %v960
        %v965 = vld [vmem:[%s6] sm:$0xf]
        %v966 = vld [vmem:[%s6 + $0x4] sm:$0xf]
        %v967 = vld [vmem:[%s6 + $0x8] sm:$0xf]
        %v968 = vld [vmem:[%s6 + $0xc] sm:$0xf]
        %v969 = vld [vmem:[%s6 + $0x10] sm:$0xf]
        %v970 = vld [vmem:[%s6 + $0x14] sm:$0xf]
        %v971 = vld [vmem:[%s6 + $0x18] sm:$0xf]
        %v972 = vld [vmem:[%s6 + $0x1c] sm:$0xf]
        %v973 = vpack.c.bf16 %v962, %v961
        %v974 = vpack.c.bf16 %v964, %v963
        %v975 = vld [vmem:[%s7] sm:$0xff]
        %v976 = vld [vmem:[%s7 + $0x8] sm:$0xff]
        %v977 = vld [vmem:[%s7 + $0x10] sm:$0xff]
        %v978 = vld [vmem:[%s7 + $0x18] sm:$0xff]
        %v979 = vld [vmem:[%s7 + $0x20] sm:$0xff]
        %v980 = vld [vmem:[%s7 + $0x28] sm:$0xff]
        %v981 = vld [vmem:[%s7 + $0x30] sm:$0xff]
        %v982 = vld [vmem:[%s7 + $0x38] sm:$0xff]
        %984 = vset.pattern.permute.xlu0 0
        %985 = vperm.xlu0 %984, %v975
        %v986 = vpop.permute.xlu0 %985
        %989 = vset.pattern.permute.xlu0 0
        %990 = vperm.xlu0 %989, %v976
        %v991 = vpop.permute.xlu0 %990
        %994 = vset.pattern.permute.xlu0 0
        %995 = vperm.xlu0 %994, %v977
        %v996 = vpop.permute.xlu0 %995
        %999 = vset.pattern.permute.xlu0 0
        %1000 = vperm.xlu0 %999, %v978
        %v1001 = vpop.permute.xlu0 %1000
        %1004 = vset.pattern.permute.xlu0 0
        %1005 = vperm.xlu0 %1004, %v979
        %v1006 = vpop.permute.xlu0 %1005
        %1009 = vset.pattern.permute.xlu0 0
        %1010 = vperm.xlu0 %1009, %v980
        %v1011 = vpop.permute.xlu0 %1010
        %1014 = vset.pattern.permute.xlu0 0
        %1015 = vperm.xlu0 %1014, %v981
        %v1016 = vpop.permute.xlu0 %1015
        %1019 = vset.pattern.permute.xlu0 0
        %1020 = vperm.xlu0 %1019, %v982
        %v1021 = vpop.permute.xlu0 %1020
        %v1031 = vunpack.c.l.b16 %v965
        %v1032 = vunpack.c.l.b16 %v966
        %v1033 = vunpack.c.l.b16 %v967
        %v1034 = vunpack.c.l.b16 %v968
        %v1035 = vunpack.c.l.b16 %v969
        %v1036 = vunpack.c.l.b16 %v970
        %v1037 = vunpack.c.l.b16 %v971
        %v1038 = vunpack.c.l.b16 %v972
        %v1039 = vpack.c.b16 %v1032, %v1031
        %v1040 = vpack.c.b16 %v1034, %v1033
        %v1041 = vpack.c.b16 %v1036, %v1035
        %v1042 = vpack.c.b16 %v1038, %v1037
        %v1044 = vsel %vm565, %v1039, 0
        %v1047 = vsel %vm565, %v1040, 0
        %v1050 = vsel %vm565, %v1041, 0
        %v1053 = vsel %vm565, %v1042, 0
        %1055 = vmatprep.subr.bf16.mxu0 0
        %1056 = vmatpush1.bf16.msra.mxu0 0
        %1057 = vmatprep.subr.bf16.mxu0 0
        %1058 = vmatpush1.bf16.msra.mxu0 0
        %1059 = vmatprep.subr.bf16.mxu0 0
        %1060 = vmatpush1.bf16.msra.mxu0 0
        %1061 = vmatprep.subr.bf16.mxu0 0
        %1062 = vmatpush1.bf16.msra.mxu0 0
        %1063 = vmatprep.subr.bf16.mxu0 0
        %1064 = vmatpush1.bf16.msra.mxu0 0
        %1065 = vmatprep.subr.bf16.mxu0 0
        %1066 = vmatpush1.bf16.msra.mxu0 0
        %1067 = vmatprep.subr.bf16.mxu0 0
        %1068 = vmatpush1.bf16.msra.mxu0 %v974
        %1069 = vmatprep.subr.bf16.mxu0 0
        %1070 = vmatpush1.bf16.msra.mxu0 %v973
        %1071 = vmatprep.subr.bf16.mxu0 0
        %1072 = vmatpush2.bf16.msra.mxu0 0
        %1073 = vmatprep.subr.bf16.mxu0 0
        %1074 = vmatpush2.bf16.msra.mxu0 0
        %1075 = vmatprep.subr.bf16.mxu0 0
        %1076 = vmatpush2.bf16.msra.mxu0 0
        %1077 = vmatprep.subr.bf16.mxu0 0
        %1078 = vmatpush2.bf16.msra.mxu0 0
        %1079 = vmatprep.subr.bf16.mxu0 0
        %1080 = vmatpush2.bf16.msra.mxu0 0
        %1081 = vmatprep.subr.bf16.mxu0 0
        %1082 = vmatpush2.bf16.msra.mxu0 0
        %1083 = vmatprep.subr.bf16.mxu0 0
        %1084 = vmatpush2.bf16.msra.mxu0 0
        %1085 = vmatprep.subr.bf16.mxu0 0
        %1086 = vmatpush2.bf16.msra.mxu0 0
        %1087 = vmatprep.mubr.bf16.mxu0 0
        %1088 = vmatmul.mubr.bf16.gmra.mxu0 %v1044
        %v1089 = vpop.f32.mrf.mxu0
        %v1090 = vadd.f32 %v986, %v1089
        %v1091 = vpop.f32.mrf.mxu0
        %v1092 = vpop.f32.mrf.mxu0
        %v1093 = vadd.f32 %v991, %v1092
        %v1094 = vpop.f32.mrf.mxu0
        %1095 = vmatprep.mubr.bf16.mxu0 0
        %1096 = vmatmul.mubr.bf16.gmra.mxu0 %v1047
        %v1097 = vpop.f32.mrf.mxu0
        %v1098 = vadd.f32 %v996, %v1097
        %v1099 = vpop.f32.mrf.mxu0
        %v1100 = vpop.f32.mrf.mxu0
        %v1101 = vadd.f32 %v1001, %v1100
        %v1102 = vpop.f32.mrf.mxu0
        %1103 = vmatprep.mubr.bf16.mxu0 0
        %1104 = vmatmul.mubr.bf16.gmra.mxu0 %v1050
        %v1105 = vpop.f32.mrf.mxu0
        %v1106 = vadd.f32 %v1006, %v1105
        %v1107 = vpop.f32.mrf.mxu0
        %v1108 = vpop.f32.mrf.mxu0
        %v1109 = vadd.f32 %v1011, %v1108
        %v1110 = vpop.f32.mrf.mxu0
        %1111 = vmatprep.mubr.bf16.mxu0 0
        %1112 = vmatmul.mubr.bf16.gmra.mxu0 %v1053
        %v1113 = vpop.f32.mrf.mxu0
        %v1114 = vadd.f32 %v1016, %v1113
        %v1115 = vpop.f32.mrf.mxu0
        %v1116 = vpop.f32.mrf.mxu0
        %v1117 = vadd.f32 %v1021, %v1116
        %v1118 = vpop.f32.mrf.mxu0
        %1119 = vdwg.mxu0
        %v1120 = vadd.f32 %v505, %v1090
        %v1121 = vadd.f32 %v506, %v1093
        %v1122 = vadd.f32 %v507, %v1098
        %v1123 = vadd.f32 %v508, %v1101
        %v1124 = vmul.f32 %v1120, %v503
        %v1125 = vmul.f32 %v1121, %v503
        %v1126 = vmul.f32 %v1122, %v503
        %v1127 = vmul.f32 %v1123, %v503
        %v1128 = vadd.f32 %v1106, 0.0
        %v1129 = vadd.f32 %v1109, 0.0
        %v1130 = vadd.f32 %v1114, 0.0
        %v1131 = vadd.f32 %v1117, 0.0
        %s1132 = scalar_lea.vmem %s5, 64
        %v1133 = vld [vmem:[%s1132] sm:$0xff]
        %v1134 = vld [vmem:[%s1132 + $0x8] sm:$0xff]
        %v1135 = vld [vmem:[%s1132 + $0x10] sm:$0xff]
        %v1136 = vld [vmem:[%s1132 + $0x18] sm:$0xff]
        %v1137 = vld [vmem:[%s1132 + $0x20] sm:$0xff]
        %v1138 = vld [vmem:[%s1132 + $0x28] sm:$0xff]
        %v1139 = vld [vmem:[%s1132 + $0x30] sm:$0xff]
        %v1140 = vld [vmem:[%s1132 + $0x38] sm:$0xff]
        %s1141 = scalar_lea.vmem %s4, 96
        %v1142 = vld [vmem:[%s1141] sm:$0xf]
        %v1143 = vld [vmem:[%s1141 + $0x4] sm:$0xf]
        %v1144 = vld [vmem:[%s1141 + $0x8] sm:$0xf]
        %v1145 = vld [vmem:[%s1141 + $0xc] sm:$0xf]
        %v1146 = vld [vmem:[%s1141 + $0x10] sm:$0xf]
        %v1147 = vld [vmem:[%s1141 + $0x14] sm:$0xf]
        %v1148 = vld [vmem:[%s1141 + $0x18] sm:$0xf]
        %v1149 = vld [vmem:[%s1141 + $0x1c] sm:$0xf]
        %1150 = vrot.lane.b32.xlu0 %v1124, 2
        %v1151 = vpop.permute.xlu0 %1150
        %1152 = vrot.lane.b32.xlu0 %v1125, 2
        %v1153 = vpop.permute.xlu0 %1152
        %1154 = vrot.lane.b32.xlu0 %v1126, 2
        %v1155 = vpop.permute.xlu0 %1154
        %1156 = vrot.lane.b32.xlu0 %v1127, 2
        %v1157 = vpop.permute.xlu0 %1156
        %v1158 = vadd.s32 %v410, 4294967294
        %vm1159 = vcmp.ge.s32.totalorder %v1158, 0
        %vm1160 = vcmp.lt.s32.totalorder %v1158, 128
        %vm1161 = vmand %vm1159, %vm1160
        %v1162 = vsel %vm1161, 1, 0
        %v1163 = vcvt.s32.f32 %v1162
        %v1164 = vmul.f32 %v1151, %v1163
        %v1165 = vmul.f32 %v1153, %v1163
        %v1166 = vmul.f32 %v1155, %v1163
        %v1167 = vmul.f32 %v1157, %v1163
        %v1168 = vpack.c.bf16 %v1165, %v1164
        %v1169 = vpack.c.bf16 %v1167, %v1166
        %v1178 = vunpack.c.l.b16 %v1142
        %v1179 = vunpack.c.l.b16 %v1143
        %v1180 = vunpack.c.l.b16 %v1144
        %v1181 = vunpack.c.l.b16 %v1145
        %v1182 = vunpack.c.l.b16 %v1146
        %v1183 = vunpack.c.l.b16 %v1147
        %v1184 = vunpack.c.l.b16 %v1148
        %v1185 = vunpack.c.l.b16 %v1149
        %v1186 = vpack.c.b16 %v1179, %v1178
        %v1187 = vpack.c.b16 %v1181, %v1180
        %v1188 = vpack.c.b16 %v1183, %v1182
        %v1189 = vpack.c.b16 %v1185, %v1184
        %v1191 = vsel %vm565, %v1186, 0
        %v1194 = vsel %vm565, %v1187, 0
        %v1197 = vsel %vm565, %v1188, 0
        %v1200 = vsel %vm565, %v1189, 0
        %1202 = vmatprep.subr.bf16.mxu0 0
        %1203 = vmatpush1.bf16.msra.mxu0 0
        %1204 = vmatprep.subr.bf16.mxu0 0
        %1205 = vmatpush1.bf16.msra.mxu0 0
        %1206 = vmatprep.subr.bf16.mxu0 0
        %1207 = vmatpush1.bf16.msra.mxu0 0
        %1208 = vmatprep.subr.bf16.mxu0 0
        %1209 = vmatpush1.bf16.msra.mxu0 0
        %1210 = vmatprep.subr.bf16.mxu0 0
        %1211 = vmatpush1.bf16.msra.mxu0 0
        %1212 = vmatprep.subr.bf16.mxu0 0
        %1213 = vmatpush1.bf16.msra.mxu0 0
        %1214 = vmatprep.subr.bf16.mxu0 0
        %1215 = vmatpush1.bf16.msra.mxu0 %v1169
        %1216 = vmatprep.subr.bf16.mxu0 0
        %1217 = vmatpush1.bf16.msra.mxu0 %v1168
        %1218 = vmatprep.subr.bf16.mxu0 0
        %1219 = vmatpush2.bf16.msra.mxu0 0
        %1220 = vmatprep.subr.bf16.mxu0 0
        %1221 = vmatpush2.bf16.msra.mxu0 0
        %1222 = vmatprep.subr.bf16.mxu0 0
        %1223 = vmatpush2.bf16.msra.mxu0 0
        %1224 = vmatprep.subr.bf16.mxu0 0
        %1225 = vmatpush2.bf16.msra.mxu0 0
        %1226 = vmatprep.subr.bf16.mxu0 0
        %1227 = vmatpush2.bf16.msra.mxu0 0
        %1228 = vmatprep.subr.bf16.mxu0 0
        %1229 = vmatpush2.bf16.msra.mxu0 0
        %1230 = vmatprep.subr.bf16.mxu0 0
        %1231 = vmatpush2.bf16.msra.mxu0 0
        %1232 = vmatprep.subr.bf16.mxu0 0
        %1233 = vmatpush2.bf16.msra.mxu0 0
        %1234 = vmatprep.mubr.bf16.mxu0 0
        %1235 = vmatmul.mubr.bf16.gmra.mxu0 %v1191
        %v1236 = vpop.f32.mrf.mxu0
        %v1237 = vadd.f32 0.0, %v1236
        %v1238 = vpop.f32.mrf.mxu0
        %v1239 = vpop.f32.mrf.mxu0
        %v1240 = vadd.f32 0.0, %v1239
        %v1241 = vpop.f32.mrf.mxu0
        %1242 = vmatprep.mubr.bf16.mxu0 0
        %1243 = vmatmul.mubr.bf16.gmra.mxu0 %v1194
        %v1244 = vpop.f32.mrf.mxu0
        %v1245 = vadd.f32 0.0, %v1244
        %v1246 = vpop.f32.mrf.mxu0
        %v1247 = vpop.f32.mrf.mxu0
        %v1248 = vadd.f32 0.0, %v1247
        %v1249 = vpop.f32.mrf.mxu0
        %1250 = vmatprep.mubr.bf16.mxu0 0
        %1251 = vmatmul.mubr.bf16.gmra.mxu0 %v1197
        %v1252 = vpop.f32.mrf.mxu0
        %v1253 = vadd.f32 0.0, %v1252
        %v1254 = vpop.f32.mrf.mxu0
        %v1255 = vpop.f32.mrf.mxu0
        %v1256 = vadd.f32 0.0, %v1255
        %v1257 = vpop.f32.mrf.mxu0
        %1258 = vmatprep.mubr.bf16.mxu0 0
        %1259 = vmatmul.mubr.bf16.gmra.mxu0 %v1200
        %v1260 = vpop.f32.mrf.mxu0
        %v1261 = vadd.f32 0.0, %v1260
        %v1262 = vpop.f32.mrf.mxu0
        %v1263 = vpop.f32.mrf.mxu0
        %v1264 = vadd.f32 0.0, %v1263
        %v1265 = vpop.f32.mrf.mxu0
        %1266 = vdwg.mxu0
        %1268 = vset.pattern.permute.xlu0 0
        %1269 = vperm.xlu0 %1268, %v1133
        %v1270 = vpop.permute.xlu0 %1269
        %1273 = vset.pattern.permute.xlu0 0
        %1274 = vperm.xlu0 %1273, %v1134
        %v1275 = vpop.permute.xlu0 %1274
        %1278 = vset.pattern.permute.xlu0 0
        %1279 = vperm.xlu0 %1278, %v1135
        %v1280 = vpop.permute.xlu0 %1279
        %1283 = vset.pattern.permute.xlu0 0
        %1284 = vperm.xlu0 %1283, %v1136
        %v1285 = vpop.permute.xlu0 %1284
        %1288 = vset.pattern.permute.xlu0 0
        %1289 = vperm.xlu0 %1288, %v1137
        %v1290 = vpop.permute.xlu0 %1289
        %1293 = vset.pattern.permute.xlu0 0
        %1294 = vperm.xlu0 %1293, %v1138
        %v1295 = vpop.permute.xlu0 %1294
        %1298 = vset.pattern.permute.xlu0 0
        %1299 = vperm.xlu0 %1298, %v1139
        %v1300 = vpop.permute.xlu0 %1299
        %1303 = vset.pattern.permute.xlu0 0
        %1304 = vperm.xlu0 %1303, %v1140
        %v1305 = vpop.permute.xlu0 %1304
        %v1307 = vadd.f32 %v1270, %v1237
        %v1308 = vadd.f32 %v1275, %v1240
        %v1309 = vadd.f32 %v1280, %v1245
        %v1310 = vadd.f32 %v1285, %v1248
        %v1311 = vadd.f32 %v1290, %v1253
        %v1312 = vadd.f32 %v1295, %v1256
        %v1313 = vadd.f32 %v1300, %v1261
        %v1314 = vadd.f32 %v1305, %v1264
        %s1315 = scalar_lea.vmem %s4, 128
        %v1316 = vld [vmem:[%s1315] sm:$0xf]
        %v1317 = vld [vmem:[%s1315 + $0x4] sm:$0xf]
        %v1318 = vld [vmem:[%s1315 + $0x8] sm:$0xf]
        %v1319 = vld [vmem:[%s1315 + $0xc] sm:$0xf]
        %v1320 = vld [vmem:[%s1315 + $0x10] sm:$0xf]
        %v1321 = vld [vmem:[%s1315 + $0x14] sm:$0xf]
        %v1322 = vld [vmem:[%s1315 + $0x18] sm:$0xf]
        %v1323 = vld [vmem:[%s1315 + $0x1c] sm:$0xf]
        %v1324 = vpack.c.bf16 %v1125, %v1124
        %v1325 = vpack.c.bf16 %v1127, %v1126
        %v1334 = vunpack.c.l.b16 %v1316
        %v1335 = vunpack.c.l.b16 %v1317
        %v1336 = vunpack.c.l.b16 %v1318
        %v1337 = vunpack.c.l.b16 %v1319
        %v1338 = vunpack.c.l.b16 %v1320
        %v1339 = vunpack.c.l.b16 %v1321
        %v1340 = vunpack.c.l.b16 %v1322
        %v1341 = vunpack.c.l.b16 %v1323
        %v1342 = vpack.c.b16 %v1335, %v1334
        %v1343 = vpack.c.b16 %v1337, %v1336
        %v1344 = vpack.c.b16 %v1339, %v1338
        %v1345 = vpack.c.b16 %v1341, %v1340
        %v1347 = vsel %vm565, %v1342, 0
        %v1350 = vsel %vm565, %v1343, 0
        %v1353 = vsel %vm565, %v1344, 0
        %v1356 = vsel %vm565, %v1345, 0
        %1358 = vmatprep.subr.bf16.mxu0 0
        %1359 = vmatpush1.bf16.msra.mxu0 0
        %1360 = vmatprep.subr.bf16.mxu0 0
        %1361 = vmatpush1.bf16.msra.mxu0 0
        %1362 = vmatprep.subr.bf16.mxu0 0
        %1363 = vmatpush1.bf16.msra.mxu0 0
        %1364 = vmatprep.subr.bf16.mxu0 0
        %1365 = vmatpush1.bf16.msra.mxu0 0
        %1366 = vmatprep.subr.bf16.mxu0 0
        %1367 = vmatpush1.bf16.msra.mxu0 0
        %1368 = vmatprep.subr.bf16.mxu0 0
        %1369 = vmatpush1.bf16.msra.mxu0 0
        %1370 = vmatprep.subr.bf16.mxu0 0
        %1371 = vmatpush1.bf16.msra.mxu0 %v1325
        %1372 = vmatprep.subr.bf16.mxu0 0
        %1373 = vmatpush1.bf16.msra.mxu0 %v1324
        %1374 = vmatprep.subr.bf16.mxu0 0
        %1375 = vmatpush2.bf16.msra.mxu0 0
        %1376 = vmatprep.subr.bf16.mxu0 0
        %1377 = vmatpush2.bf16.msra.mxu0 0
        %1378 = vmatprep.subr.bf16.mxu0 0
        %1379 = vmatpush2.bf16.msra.mxu0 0
        %1380 = vmatprep.subr.bf16.mxu0 0
        %1381 = vmatpush2.bf16.msra.mxu0 0
        %1382 = vmatprep.subr.bf16.mxu0 0
        %1383 = vmatpush2.bf16.msra.mxu0 0
        %1384 = vmatprep.subr.bf16.mxu0 0
        %1385 = vmatpush2.bf16.msra.mxu0 0
        %1386 = vmatprep.subr.bf16.mxu0 0
        %1387 = vmatpush2.bf16.msra.mxu0 0
        %1388 = vmatprep.subr.bf16.mxu0 0
        %1389 = vmatpush2.bf16.msra.mxu0 0
        %1390 = vmatprep.mubr.bf16.mxu0 0
        %1391 = vmatmul.mubr.bf16.gmra.mxu0 %v1347
        %v1392 = vpop.f32.mrf.mxu0
        %v1393 = vadd.f32 0.0, %v1392
        %v1394 = vpop.f32.mrf.mxu0
        %v1395 = vpop.f32.mrf.mxu0
        %v1396 = vadd.f32 0.0, %v1395
        %v1397 = vpop.f32.mrf.mxu0
        %1398 = vmatprep.mubr.bf16.mxu0 0
        %1399 = vmatmul.mubr.bf16.gmra.mxu0 %v1350
        %v1400 = vpop.f32.mrf.mxu0
        %v1401 = vadd.f32 0.0, %v1400
        %v1402 = vpop.f32.mrf.mxu0
        %v1403 = vpop.f32.mrf.mxu0
        %v1404 = vadd.f32 0.0, %v1403
        %v1405 = vpop.f32.mrf.mxu0
        %1406 = vmatprep.mubr.bf16.mxu0 0
        %1407 = vmatmul.mubr.bf16.gmra.mxu0 %v1353
        %v1408 = vpop.f32.mrf.mxu0
        %v1409 = vadd.f32 0.0, %v1408
        %v1410 = vpop.f32.mrf.mxu0
        %v1411 = vpop.f32.mrf.mxu0
        %v1412 = vadd.f32 0.0, %v1411
        %v1413 = vpop.f32.mrf.mxu0
        %1414 = vmatprep.mubr.bf16.mxu0 0
        %1415 = vmatmul.mubr.bf16.gmra.mxu0 %v1356
        %v1416 = vpop.f32.mrf.mxu0
        %v1417 = vadd.f32 0.0, %v1416
        %v1418 = vpop.f32.mrf.mxu0
        %v1419 = vpop.f32.mrf.mxu0
        %v1420 = vadd.f32 0.0, %v1419
        %v1421 = vpop.f32.mrf.mxu0
        %1422 = vdwg.mxu0
        %v1423 = vadd.f32 %v1307, %v1393
        %v1424 = vadd.f32 %v1308, %v1396
        %v1425 = vadd.f32 %v1309, %v1401
        %v1426 = vadd.f32 %v1310, %v1404
        %v1427 = vadd.f32 %v1311, %v1409
        %v1428 = vadd.f32 %v1312, %v1412
        %v1429 = vadd.f32 %v1313, %v1417
        %v1430 = vadd.f32 %v1314, %v1420
        %s1431 = scalar_lea.vmem %s4, 160
        %v1432 = vld [vmem:[%s1431] sm:$0xf]
        %v1433 = vld [vmem:[%s1431 + $0x4] sm:$0xf]
        %v1434 = vld [vmem:[%s1431 + $0x8] sm:$0xf]
        %v1435 = vld [vmem:[%s1431 + $0xc] sm:$0xf]
        %v1436 = vld [vmem:[%s1431 + $0x10] sm:$0xf]
        %v1437 = vld [vmem:[%s1431 + $0x14] sm:$0xf]
        %v1438 = vld [vmem:[%s1431 + $0x18] sm:$0xf]
        %v1439 = vld [vmem:[%s1431 + $0x1c] sm:$0xf]
        %1440 = vrot.lane.b32.xlu0 %v1124, 126
        %v1441 = vpop.permute.xlu0 %1440
        %1442 = vrot.lane.b32.xlu0 %v1125, 126
        %v1443 = vpop.permute.xlu0 %1442
        %1444 = vrot.lane.b32.xlu0 %v1126, 126
        %v1445 = vpop.permute.xlu0 %1444
        %1446 = vrot.lane.b32.xlu0 %v1127, 126
        %v1447 = vpop.permute.xlu0 %1446
        %v1448 = vadd.s32 %v410, 2
        %vm1449 = vcmp.ge.s32.totalorder %v1448, 0
        %vm1450 = vcmp.lt.s32.totalorder %v1448, 128
        %vm1451 = vmand %vm1449, %vm1450
        %v1452 = vsel %vm1451, 1, 0
        %v1453 = vcvt.s32.f32 %v1452
        %v1454 = vmul.f32 %v1441, %v1453
        %v1455 = vmul.f32 %v1443, %v1453
        %v1456 = vmul.f32 %v1445, %v1453
        %v1457 = vmul.f32 %v1447, %v1453
        %v1458 = vpack.c.bf16 %v1455, %v1454
        %v1459 = vpack.c.bf16 %v1457, %v1456
        %v1468 = vunpack.c.l.b16 %v1432
        %v1469 = vunpack.c.l.b16 %v1433
        %v1470 = vunpack.c.l.b16 %v1434
        %v1471 = vunpack.c.l.b16 %v1435
        %v1472 = vunpack.c.l.b16 %v1436
        %v1473 = vunpack.c.l.b16 %v1437
        %v1474 = vunpack.c.l.b16 %v1438
        %v1475 = vunpack.c.l.b16 %v1439
        %v1476 = vpack.c.b16 %v1469, %v1468
        %v1477 = vpack.c.b16 %v1471, %v1470
        %v1478 = vpack.c.b16 %v1473, %v1472
        %v1479 = vpack.c.b16 %v1475, %v1474
        %v1481 = vsel %vm565, %v1476, 0
        %v1484 = vsel %vm565, %v1477, 0
        %v1487 = vsel %vm565, %v1478, 0
        %v1490 = vsel %vm565, %v1479, 0
        %1492 = vmatprep.subr.bf16.mxu0 0
        %1493 = vmatpush1.bf16.msra.mxu0 0
        %1494 = vmatprep.subr.bf16.mxu0 0
        %1495 = vmatpush1.bf16.msra.mxu0 0
        %1496 = vmatprep.subr.bf16.mxu0 0
        %1497 = vmatpush1.bf16.msra.mxu0 0
        %1498 = vmatprep.subr.bf16.mxu0 0
        %1499 = vmatpush1.bf16.msra.mxu0 0
        %1500 = vmatprep.subr.bf16.mxu0 0
        %1501 = vmatpush1.bf16.msra.mxu0 0
        %1502 = vmatprep.subr.bf16.mxu0 0
        %1503 = vmatpush1.bf16.msra.mxu0 0
        %1504 = vmatprep.subr.bf16.mxu0 0
        %1505 = vmatpush1.bf16.msra.mxu0 %v1459
        %1506 = vmatprep.subr.bf16.mxu0 0
        %1507 = vmatpush1.bf16.msra.mxu0 %v1458
        %1508 = vmatprep.subr.bf16.mxu0 0
        %1509 = vmatpush2.bf16.msra.mxu0 0
        %1510 = vmatprep.subr.bf16.mxu0 0
        %1511 = vmatpush2.bf16.msra.mxu0 0
        %1512 = vmatprep.subr.bf16.mxu0 0
        %1513 = vmatpush2.bf16.msra.mxu0 0
        %1514 = vmatprep.subr.bf16.mxu0 0
        %1515 = vmatpush2.bf16.msra.mxu0 0
        %1516 = vmatprep.subr.bf16.mxu0 0
        %1517 = vmatpush2.bf16.msra.mxu0 0
        %1518 = vmatprep.subr.bf16.mxu0 0
        %1519 = vmatpush2.bf16.msra.mxu0 0
        %1520 = vmatprep.subr.bf16.mxu0 0
        %1521 = vmatpush2.bf16.msra.mxu0 0
        %1522 = vmatprep.subr.bf16.mxu0 0
        %1523 = vmatpush2.bf16.msra.mxu0 0
        %1524 = vmatprep.mubr.bf16.mxu0 0
        %1525 = vmatmul.mubr.bf16.gmra.mxu0 %v1481
        %v1526 = vpop.f32.mrf.mxu0
        %v1527 = vadd.f32 0.0, %v1526
        %v1528 = vpop.f32.mrf.mxu0
        %v1529 = vpop.f32.mrf.mxu0
        %v1530 = vadd.f32 0.0, %v1529
        %v1531 = vpop.f32.mrf.mxu0
        %1532 = vmatprep.mubr.bf16.mxu0 0
        %1533 = vmatmul.mubr.bf16.gmra.mxu0 %v1484
        %v1534 = vpop.f32.mrf.mxu0
        %v1535 = vadd.f32 0.0, %v1534
        %v1536 = vpop.f32.mrf.mxu0
        %v1537 = vpop.f32.mrf.mxu0
        %v1538 = vadd.f32 0.0, %v1537
        %v1539 = vpop.f32.mrf.mxu0
        %1540 = vmatprep.mubr.bf16.mxu0 0
        %1541 = vmatmul.mubr.bf16.gmra.mxu0 %v1487
        %v1542 = vpop.f32.mrf.mxu0
        %v1543 = vadd.f32 0.0, %v1542
        %v1544 = vpop.f32.mrf.mxu0
        %v1545 = vpop.f32.mrf.mxu0
        %v1546 = vadd.f32 0.0, %v1545
        %v1547 = vpop.f32.mrf.mxu0
        %1548 = vmatprep.mubr.bf16.mxu0 0
        %1549 = vmatmul.mubr.bf16.gmra.mxu0 %v1490
        %v1550 = vpop.f32.mrf.mxu0
        %v1551 = vadd.f32 0.0, %v1550
        %v1552 = vpop.f32.mrf.mxu0
        %v1553 = vpop.f32.mrf.mxu0
        %v1554 = vadd.f32 0.0, %v1553
        %v1555 = vpop.f32.mrf.mxu0
        %1556 = vdwg.mxu0
        %v1557 = vadd.f32 %v1423, %v1527
        %v1558 = vadd.f32 %v1424, %v1530
        %v1559 = vadd.f32 %v1425, %v1535
        %v1560 = vadd.f32 %v1426, %v1538
        %v1561 = vadd.f32 %v1427, %v1543
        %v1562 = vadd.f32 %v1428, %v1546
        %v1563 = vadd.f32 %v1429, %v1551
        %v1564 = vadd.f32 %v1430, %v1554
        %v1565 = vtanh.pop %v1557
        %v1566 = vtanh.pop %v1558
        %v1567 = vtanh.pop %v1559
        %v1568 = vtanh.pop %v1560
        %v1569 = vmul.f32 %v1561, 0.5
        %v1570 = vmul.f32 %v1562, 0.5
        %v1571 = vmul.f32 %v1563, 0.5
        %v1572 = vmul.f32 %v1564, 0.5
        %v1573 = vtanh.pop %v1569
        %v1574 = vtanh.pop %v1570
        %v1575 = vtanh.pop %v1571
        %v1576 = vtanh.pop %v1572
        %v1577 = vadd.f32 %v1573, 1.0
        %v1578 = vadd.f32 %v1574, 1.0
        %v1579 = vadd.f32 %v1575, 1.0
        %v1580 = vadd.f32 %v1576, 1.0
        %v1581 = vmul.f32 %v1577, 0.5
        %v1582 = vmul.f32 %v1578, 0.5
        %v1583 = vmul.f32 %v1579, 0.5
        %v1584 = vmul.f32 %v1580, 0.5
        %v1585 = vmul.f32 %v1565, %v1581
        %v1586 = vmul.f32 %v1566, %v1582
        %v1587 = vmul.f32 %v1567, %v1583
        %v1588 = vmul.f32 %v1568, %v1584
        %s1589 = scalar_lea.vmem %s6, 32
        %v1590 = vld [vmem:[%s1589] sm:$0xf]
        %v1591 = vld [vmem:[%s1589 + $0x4] sm:$0xf]
        %v1592 = vld [vmem:[%s1589 + $0x8] sm:$0xf]
        %v1593 = vld [vmem:[%s1589 + $0xc] sm:$0xf]
        %v1594 = vld [vmem:[%s1589 + $0x10] sm:$0xf]
        %v1595 = vld [vmem:[%s1589 + $0x14] sm:$0xf]
        %v1596 = vld [vmem:[%s1589 + $0x18] sm:$0xf]
        %v1597 = vld [vmem:[%s1589 + $0x1c] sm:$0xf]
        %v1598 = vpack.c.bf16 %v1586, %v1585
        %v1599 = vpack.c.bf16 %v1588, %v1587
        %s1600 = scalar_lea.vmem %s7, 64
        %v1601 = vld [vmem:[%s1600] sm:$0xff]
        %v1602 = vld [vmem:[%s1600 + $0x8] sm:$0xff]
        %v1603 = vld [vmem:[%s1600 + $0x10] sm:$0xff]
        %v1604 = vld [vmem:[%s1600 + $0x18] sm:$0xff]
        %v1605 = vld [vmem:[%s1600 + $0x20] sm:$0xff]
        %v1606 = vld [vmem:[%s1600 + $0x28] sm:$0xff]
        %v1607 = vld [vmem:[%s1600 + $0x30] sm:$0xff]
        %v1608 = vld [vmem:[%s1600 + $0x38] sm:$0xff]
        %1610 = vset.pattern.permute.xlu0 0
        %1611 = vperm.xlu0 %1610, %v1601
        %v1612 = vpop.permute.xlu0 %1611
        %1615 = vset.pattern.permute.xlu0 0
        %1616 = vperm.xlu0 %1615, %v1602
        %v1617 = vpop.permute.xlu0 %1616
        %1620 = vset.pattern.permute.xlu0 0
        %1621 = vperm.xlu0 %1620, %v1603
        %v1622 = vpop.permute.xlu0 %1621
        %1625 = vset.pattern.permute.xlu0 0
        %1626 = vperm.xlu0 %1625, %v1604
        %v1627 = vpop.permute.xlu0 %1626
        %1630 = vset.pattern.permute.xlu0 0
        %1631 = vperm.xlu0 %1630, %v1605
        %v1632 = vpop.permute.xlu0 %1631
        %1635 = vset.pattern.permute.xlu0 0
        %1636 = vperm.xlu0 %1635, %v1606
        %v1637 = vpop.permute.xlu0 %1636
        %1640 = vset.pattern.permute.xlu0 0
        %1641 = vperm.xlu0 %1640, %v1607
        %v1642 = vpop.permute.xlu0 %1641
        %1645 = vset.pattern.permute.xlu0 0
        %1646 = vperm.xlu0 %1645, %v1608
        %v1647 = vpop.permute.xlu0 %1646
        %v1657 = vunpack.c.l.b16 %v1590
        %v1658 = vunpack.c.l.b16 %v1591
        %v1659 = vunpack.c.l.b16 %v1592
        %v1660 = vunpack.c.l.b16 %v1593
        %v1661 = vunpack.c.l.b16 %v1594
        %v1662 = vunpack.c.l.b16 %v1595
        %v1663 = vunpack.c.l.b16 %v1596
        %v1664 = vunpack.c.l.b16 %v1597
        %v1665 = vpack.c.b16 %v1658, %v1657
        %v1666 = vpack.c.b16 %v1660, %v1659
        %v1667 = vpack.c.b16 %v1662, %v1661
        %v1668 = vpack.c.b16 %v1664, %v1663
        %v1670 = vsel %vm565, %v1665, 0
        %v1673 = vsel %vm565, %v1666, 0
        %v1676 = vsel %vm565, %v1667, 0
        %v1679 = vsel %vm565, %v1668, 0
        %1681 = vmatprep.subr.bf16.mxu0 0
        %1682 = vmatpush1.bf16.msra.mxu0 0
        %1683 = vmatprep.subr.bf16.mxu0 0
        %1684 = vmatpush1.bf16.msra.mxu0 0
        %1685 = vmatprep.subr.bf16.mxu0 0
        %1686 = vmatpush1.bf16.msra.mxu0 0
        %1687 = vmatprep.subr.bf16.mxu0 0
        %1688 = vmatpush1.bf16.msra.mxu0 0
        %1689 = vmatprep.subr.bf16.mxu0 0
        %1690 = vmatpush1.bf16.msra.mxu0 0
        %1691 = vmatprep.subr.bf16.mxu0 0
        %1692 = vmatpush1.bf16.msra.mxu0 0
        %1693 = vmatprep.subr.bf16.mxu0 0
        %1694 = vmatpush1.bf16.msra.mxu0 %v1599
        %1695 = vmatprep.subr.bf16.mxu0 0
        %1696 = vmatpush1.bf16.msra.mxu0 %v1598
        %1697 = vmatprep.subr.bf16.mxu0 0
        %1698 = vmatpush2.bf16.msra.mxu0 0
        %1699 = vmatprep.subr.bf16.mxu0 0
        %1700 = vmatpush2.bf16.msra.mxu0 0
        %1701 = vmatprep.subr.bf16.mxu0 0
        %1702 = vmatpush2.bf16.msra.mxu0 0
        %1703 = vmatprep.subr.bf16.mxu0 0
        %1704 = vmatpush2.bf16.msra.mxu0 0
        %1705 = vmatprep.subr.bf16.mxu0 0
        %1706 = vmatpush2.bf16.msra.mxu0 0
        %1707 = vmatprep.subr.bf16.mxu0 0
        %1708 = vmatpush2.bf16.msra.mxu0 0
        %1709 = vmatprep.subr.bf16.mxu0 0
        %1710 = vmatpush2.bf16.msra.mxu0 0
        %1711 = vmatprep.subr.bf16.mxu0 0
        %1712 = vmatpush2.bf16.msra.mxu0 0
        %1713 = vmatprep.mubr.bf16.mxu0 0
        %1714 = vmatmul.mubr.bf16.gmra.mxu0 %v1670
        %v1715 = vpop.f32.mrf.mxu0
        %v1716 = vadd.f32 %v1612, %v1715
        %v1717 = vpop.f32.mrf.mxu0
        %v1718 = vpop.f32.mrf.mxu0
        %v1719 = vadd.f32 %v1617, %v1718
        %v1720 = vpop.f32.mrf.mxu0
        %1721 = vmatprep.mubr.bf16.mxu0 0
        %1722 = vmatmul.mubr.bf16.gmra.mxu0 %v1673
        %v1723 = vpop.f32.mrf.mxu0
        %v1724 = vadd.f32 %v1622, %v1723
        %v1725 = vpop.f32.mrf.mxu0
        %v1726 = vpop.f32.mrf.mxu0
        %v1727 = vadd.f32 %v1627, %v1726
        %v1728 = vpop.f32.mrf.mxu0
        %1729 = vmatprep.mubr.bf16.mxu0 0
        %1730 = vmatmul.mubr.bf16.gmra.mxu0 %v1676
        %v1731 = vpop.f32.mrf.mxu0
        %v1732 = vadd.f32 %v1632, %v1731
        %v1733 = vpop.f32.mrf.mxu0
        %v1734 = vpop.f32.mrf.mxu0
        %v1735 = vadd.f32 %v1637, %v1734
        %v1736 = vpop.f32.mrf.mxu0
        %1737 = vmatprep.mubr.bf16.mxu0 0
        %1738 = vmatmul.mubr.bf16.gmra.mxu0 %v1679
        %v1739 = vpop.f32.mrf.mxu0
        %v1740 = vadd.f32 %v1642, %v1739
        %v1741 = vpop.f32.mrf.mxu0
        %v1742 = vpop.f32.mrf.mxu0
        %v1743 = vadd.f32 %v1647, %v1742
        %v1744 = vpop.f32.mrf.mxu0
        %1745 = vdwg.mxu0
        %v1746 = vadd.f32 %v1124, %v1716
        %v1747 = vadd.f32 %v1125, %v1719
        %v1748 = vadd.f32 %v1126, %v1724
        %v1749 = vadd.f32 %v1127, %v1727
        %v1750 = vmul.f32 %v1746, %v503
        %v1751 = vmul.f32 %v1747, %v503
        %v1752 = vmul.f32 %v1748, %v503
        %v1753 = vmul.f32 %v1749, %v503
        %v1754 = vadd.f32 %v1128, %v1732
        %v1755 = vadd.f32 %v1129, %v1735
        %v1756 = vadd.f32 %v1130, %v1740
        %v1757 = vadd.f32 %v1131, %v1743
        %s1758 = scalar_lea.vmem %s5, 128
        %v1759 = vld [vmem:[%s1758] sm:$0xff]
        %v1760 = vld [vmem:[%s1758 + $0x8] sm:$0xff]
        %v1761 = vld [vmem:[%s1758 + $0x10] sm:$0xff]
        %v1762 = vld [vmem:[%s1758 + $0x18] sm:$0xff]
        %v1763 = vld [vmem:[%s1758 + $0x20] sm:$0xff]
        %v1764 = vld [vmem:[%s1758 + $0x28] sm:$0xff]
        %v1765 = vld [vmem:[%s1758 + $0x30] sm:$0xff]
        %v1766 = vld [vmem:[%s1758 + $0x38] sm:$0xff]
        %s1767 = scalar_lea.vmem %s4, 192
        %v1768 = vld [vmem:[%s1767] sm:$0xf]
        %v1769 = vld [vmem:[%s1767 + $0x4] sm:$0xf]
        %v1770 = vld [vmem:[%s1767 + $0x8] sm:$0xf]
        %v1771 = vld [vmem:[%s1767 + $0xc] sm:$0xf]
        %v1772 = vld [vmem:[%s1767 + $0x10] sm:$0xf]
        %v1773 = vld [vmem:[%s1767 + $0x14] sm:$0xf]
        %v1774 = vld [vmem:[%s1767 + $0x18] sm:$0xf]
        %v1775 = vld [vmem:[%s1767 + $0x1c] sm:$0xf]
        %1776 = vrot.lane.b32.xlu0 %v1750, 4
        %v1777 = vpop.permute.xlu0 %1776
        %1778 = vrot.lane.b32.xlu0 %v1751, 4
        %v1779 = vpop.permute.xlu0 %1778
        %1780 = vrot.lane.b32.xlu0 %v1752, 4
        %v1781 = vpop.permute.xlu0 %1780
        %1782 = vrot.lane.b32.xlu0 %v1753, 4
        %v1783 = vpop.permute.xlu0 %1782
        %v1784 = vadd.s32 %v410, 4294967292
        %vm1785 = vcmp.ge.s32.totalorder %v1784, 0
        %vm1786 = vcmp.lt.s32.totalorder %v1784, 128
        %vm1787 = vmand %vm1785, %vm1786
        %v1788 = vsel %vm1787, 1, 0
        %v1789 = vcvt.s32.f32 %v1788
        %v1790 = vmul.f32 %v1777, %v1789
        %v1791 = vmul.f32 %v1779, %v1789
        %v1792 = vmul.f32 %v1781, %v1789
        %v1793 = vmul.f32 %v1783, %v1789
        %v1794 = vpack.c.bf16 %v1791, %v1790
        %v1795 = vpack.c.bf16 %v1793, %v1792
        %v1804 = vunpack.c.l.b16 %v1768
        %v1805 = vunpack.c.l.b16 %v1769
        %v1806 = vunpack.c.l.b16 %v1770
        %v1807 = vunpack.c.l.b16 %v1771
        %v1808 = vunpack.c.l.b16 %v1772
        %v1809 = vunpack.c.l.b16 %v1773
        %v1810 = vunpack.c.l.b16 %v1774
        %v1811 = vunpack.c.l.b16 %v1775
        %v1812 = vpack.c.b16 %v1805, %v1804
        %v1813 = vpack.c.b16 %v1807, %v1806
        %v1814 = vpack.c.b16 %v1809, %v1808
        %v1815 = vpack.c.b16 %v1811, %v1810
        %v1817 = vsel %vm565, %v1812, 0
        %v1820 = vsel %vm565, %v1813, 0
        %v1823 = vsel %vm565, %v1814, 0
        %v1826 = vsel %vm565, %v1815, 0
        %1828 = vmatprep.subr.bf16.mxu0 0
        %1829 = vmatpush1.bf16.msra.mxu0 0
        %1830 = vmatprep.subr.bf16.mxu0 0
        %1831 = vmatpush1.bf16.msra.mxu0 0
        %1832 = vmatprep.subr.bf16.mxu0 0
        %1833 = vmatpush1.bf16.msra.mxu0 0
        %1834 = vmatprep.subr.bf16.mxu0 0
        %1835 = vmatpush1.bf16.msra.mxu0 0
        %1836 = vmatprep.subr.bf16.mxu0 0
        %1837 = vmatpush1.bf16.msra.mxu0 0
        %1838 = vmatprep.subr.bf16.mxu0 0
        %1839 = vmatpush1.bf16.msra.mxu0 0
        %1840 = vmatprep.subr.bf16.mxu0 0
        %1841 = vmatpush1.bf16.msra.mxu0 %v1795
        %1842 = vmatprep.subr.bf16.mxu0 0
        %1843 = vmatpush1.bf16.msra.mxu0 %v1794
        %1844 = vmatprep.subr.bf16.mxu0 0
        %1845 = vmatpush2.bf16.msra.mxu0 0
        %1846 = vmatprep.subr.bf16.mxu0 0
        %1847 = vmatpush2.bf16.msra.mxu0 0
        %1848 = vmatprep.subr.bf16.mxu0 0
        %1849 = vmatpush2.bf16.msra.mxu0 0
        %1850 = vmatprep.subr.bf16.mxu0 0
        %1851 = vmatpush2.bf16.msra.mxu0 0
        %1852 = vmatprep.subr.bf16.mxu0 0
        %1853 = vmatpush2.bf16.msra.mxu0 0
        %1854 = vmatprep.subr.bf16.mxu0 0
        %1855 = vmatpush2.bf16.msra.mxu0 0
        %1856 = vmatprep.subr.bf16.mxu0 0
        %1857 = vmatpush2.bf16.msra.mxu0 0
        %1858 = vmatprep.subr.bf16.mxu0 0
        %1859 = vmatpush2.bf16.msra.mxu0 0
        %1860 = vmatprep.mubr.bf16.mxu0 0
        %1861 = vmatmul.mubr.bf16.gmra.mxu0 %v1817
        %v1862 = vpop.f32.mrf.mxu0
        %v1863 = vadd.f32 0.0, %v1862
        %v1864 = vpop.f32.mrf.mxu0
        %v1865 = vpop.f32.mrf.mxu0
        %v1866 = vadd.f32 0.0, %v1865
        %v1867 = vpop.f32.mrf.mxu0
        %1868 = vmatprep.mubr.bf16.mxu0 0
        %1869 = vmatmul.mubr.bf16.gmra.mxu0 %v1820
        %v1870 = vpop.f32.mrf.mxu0
        %v1871 = vadd.f32 0.0, %v1870
        %v1872 = vpop.f32.mrf.mxu0
        %v1873 = vpop.f32.mrf.mxu0
        %v1874 = vadd.f32 0.0, %v1873
        %v1875 = vpop.f32.mrf.mxu0
        %1876 = vmatprep.mubr.bf16.mxu0 0
        %1877 = vmatmul.mubr.bf16.gmra.mxu0 %v1823
        %v1878 = vpop.f32.mrf.mxu0
        %v1879 = vadd.f32 0.0, %v1878
        %v1880 = vpop.f32.mrf.mxu0
        %v1881 = vpop.f32.mrf.mxu0
        %v1882 = vadd.f32 0.0, %v1881
        %v1883 = vpop.f32.mrf.mxu0
        %1884 = vmatprep.mubr.bf16.mxu0 0
        %1885 = vmatmul.mubr.bf16.gmra.mxu0 %v1826
        %v1886 = vpop.f32.mrf.mxu0
        %v1887 = vadd.f32 0.0, %v1886
        %v1888 = vpop.f32.mrf.mxu0
        %v1889 = vpop.f32.mrf.mxu0
        %v1890 = vadd.f32 0.0, %v1889
        %v1891 = vpop.f32.mrf.mxu0
        %1892 = vdwg.mxu0
        %1894 = vset.pattern.permute.xlu0 0
        %1895 = vperm.xlu0 %1894, %v1759
        %v1896 = vpop.permute.xlu0 %1895
        %1899 = vset.pattern.permute.xlu0 0
        %1900 = vperm.xlu0 %1899, %v1760
        %v1901 = vpop.permute.xlu0 %1900
        %1904 = vset.pattern.permute.xlu0 0
        %1905 = vperm.xlu0 %1904, %v1761
        %v1906 = vpop.permute.xlu0 %1905
        %1909 = vset.pattern.permute.xlu0 0
        %1910 = vperm.xlu0 %1909, %v1762
        %v1911 = vpop.permute.xlu0 %1910
        %1914 = vset.pattern.permute.xlu0 0
        %1915 = vperm.xlu0 %1914, %v1763
        %v1916 = vpop.permute.xlu0 %1915
        %1919 = vset.pattern.permute.xlu0 0
        %1920 = vperm.xlu0 %1919, %v1764
        %v1921 = vpop.permute.xlu0 %1920
        %1924 = vset.pattern.permute.xlu0 0
        %1925 = vperm.xlu0 %1924, %v1765
        %v1926 = vpop.permute.xlu0 %1925
        %1929 = vset.pattern.permute.xlu0 0
        %1930 = vperm.xlu0 %1929, %v1766
        %v1931 = vpop.permute.xlu0 %1930
        %v1933 = vadd.f32 %v1896, %v1863
        %v1934 = vadd.f32 %v1901, %v1866
        %v1935 = vadd.f32 %v1906, %v1871
        %v1936 = vadd.f32 %v1911, %v1874
        %v1937 = vadd.f32 %v1916, %v1879
        %v1938 = vadd.f32 %v1921, %v1882
        %v1939 = vadd.f32 %v1926, %v1887
        %v1940 = vadd.f32 %v1931, %v1890
        %s1941 = scalar_lea.vmem %s4, 224
        %v1942 = vld [vmem:[%s1941] sm:$0xf]
        %v1943 = vld [vmem:[%s1941 + $0x4] sm:$0xf]
        %v1944 = vld [vmem:[%s1941 + $0x8] sm:$0xf]
        %v1945 = vld [vmem:[%s1941 + $0xc] sm:$0xf]
        %v1946 = vld [vmem:[%s1941 + $0x10] sm:$0xf]
        %v1947 = vld [vmem:[%s1941 + $0x14] sm:$0xf]
        %v1948 = vld [vmem:[%s1941 + $0x18] sm:$0xf]
        %v1949 = vld [vmem:[%s1941 + $0x1c] sm:$0xf]
        %v1950 = vpack.c.bf16 %v1751, %v1750
        %v1951 = vpack.c.bf16 %v1753, %v1752
        %v1960 = vunpack.c.l.b16 %v1942
        %v1961 = vunpack.c.l.b16 %v1943
        %v1962 = vunpack.c.l.b16 %v1944
        %v1963 = vunpack.c.l.b16 %v1945
        %v1964 = vunpack.c.l.b16 %v1946
        %v1965 = vunpack.c.l.b16 %v1947
        %v1966 = vunpack.c.l.b16 %v1948
        %v1967 = vunpack.c.l.b16 %v1949
        %v1968 = vpack.c.b16 %v1961, %v1960
        %v1969 = vpack.c.b16 %v1963, %v1962
        %v1970 = vpack.c.b16 %v1965, %v1964
        %v1971 = vpack.c.b16 %v1967, %v1966
        %v1973 = vsel %vm565, %v1968, 0
        %v1976 = vsel %vm565, %v1969, 0
        %v1979 = vsel %vm565, %v1970, 0
        %v1982 = vsel %vm565, %v1971, 0
        %1984 = vmatprep.subr.bf16.mxu0 0
        %1985 = vmatpush1.bf16.msra.mxu0 0
        %1986 = vmatprep.subr.bf16.mxu0 0
        %1987 = vmatpush1.bf16.msra.mxu0 0
        %1988 = vmatprep.subr.bf16.mxu0 0
        %1989 = vmatpush1.bf16.msra.mxu0 0
        %1990 = vmatprep.subr.bf16.mxu0 0
        %1991 = vmatpush1.bf16.msra.mxu0 0
        %1992 = vmatprep.subr.bf16.mxu0 0
        %1993 = vmatpush1.bf16.msra.mxu0 0
        %1994 = vmatprep.subr.bf16.mxu0 0
        %1995 = vmatpush1.bf16.msra.mxu0 0
        %1996 = vmatprep.subr.bf16.mxu0 0
        %1997 = vmatpush1.bf16.msra.mxu0 %v1951
        %1998 = vmatprep.subr.bf16.mxu0 0
        %1999 = vmatpush1.bf16.msra.mxu0 %v1950
        %2000 = vmatprep.subr.bf16.mxu0 0
        %2001 = vmatpush2.bf16.msra.mxu0 0
        %2002 = vmatprep.subr.bf16.mxu0 0
        %2003 = vmatpush2.bf16.msra.mxu0 0
        %2004 = vmatprep.subr.bf16.mxu0 0
        %2005 = vmatpush2.bf16.msra.mxu0 0
        %2006 = vmatprep.subr.bf16.mxu0 0
        %2007 = vmatpush2.bf16.msra.mxu0 0
        %2008 = vmatprep.subr.bf16.mxu0 0
        %2009 = vmatpush2.bf16.msra.mxu0 0
        %2010 = vmatprep.subr.bf16.mxu0 0
        %2011 = vmatpush2.bf16.msra.mxu0 0
        %2012 = vmatprep.subr.bf16.mxu0 0
        %2013 = vmatpush2.bf16.msra.mxu0 0
        %2014 = vmatprep.subr.bf16.mxu0 0
        %2015 = vmatpush2.bf16.msra.mxu0 0
        %2016 = vmatprep.mubr.bf16.mxu0 0
        %2017 = vmatmul.mubr.bf16.gmra.mxu0 %v1973
        %v2018 = vpop.f32.mrf.mxu0
        %v2019 = vadd.f32 0.0, %v2018
        %v2020 = vpop.f32.mrf.mxu0
        %v2021 = vpop.f32.mrf.mxu0
        %v2022 = vadd.f32 0.0, %v2021
        %v2023 = vpop.f32.mrf.mxu0
        %2024 = vmatprep.mubr.bf16.mxu0 0
        %2025 = vmatmul.mubr.bf16.gmra.mxu0 %v1976
        %v2026 = vpop.f32.mrf.mxu0
        %v2027 = vadd.f32 0.0, %v2026
        %v2028 = vpop.f32.mrf.mxu0
        %v2029 = vpop.f32.mrf.mxu0
        %v2030 = vadd.f32 0.0, %v2029
        %v2031 = vpop.f32.mrf.mxu0
        %2032 = vmatprep.mubr.bf16.mxu0 0
        %2033 = vmatmul.mubr.bf16.gmra.mxu0 %v1979
        %v2034 = vpop.f32.mrf.mxu0
        %v2035 = vadd.f32 0.0, %v2034
        %v2036 = vpop.f32.mrf.mxu0
        %v2037 = vpop.f32.mrf.mxu0
        %v2038 = vadd.f32 0.0, %v2037
        %v2039 = vpop.f32.mrf.mxu0
        %2040 = vmatprep.mubr.bf16.mxu0 0
        %2041 = vmatmul.mubr.bf16.gmra.mxu0 %v1982
        %v2042 = vpop.f32.mrf.mxu0
        %v2043 = vadd.f32 0.0, %v2042
        %v2044 = vpop.f32.mrf.mxu0
        %v2045 = vpop.f32.mrf.mxu0
        %v2046 = vadd.f32 0.0, %v2045
        %v2047 = vpop.f32.mrf.mxu0
        %2048 = vdwg.mxu0
        %v2049 = vadd.f32 %v1933, %v2019
        %v2050 = vadd.f32 %v1934, %v2022
        %v2051 = vadd.f32 %v1935, %v2027
        %v2052 = vadd.f32 %v1936, %v2030
        %v2053 = vadd.f32 %v1937, %v2035
        %v2054 = vadd.f32 %v1938, %v2038
        %v2055 = vadd.f32 %v1939, %v2043
        %v2056 = vadd.f32 %v1940, %v2046
        %s2057 = scalar_lea.vmem %s4, 256
        %v2058 = vld [vmem:[%s2057] sm:$0xf]
        %v2059 = vld [vmem:[%s2057 + $0x4] sm:$0xf]
        %v2060 = vld [vmem:[%s2057 + $0x8] sm:$0xf]
        %v2061 = vld [vmem:[%s2057 + $0xc] sm:$0xf]
        %v2062 = vld [vmem:[%s2057 + $0x10] sm:$0xf]
        %v2063 = vld [vmem:[%s2057 + $0x14] sm:$0xf]
        %v2064 = vld [vmem:[%s2057 + $0x18] sm:$0xf]
        %v2065 = vld [vmem:[%s2057 + $0x1c] sm:$0xf]
        %2066 = vrot.lane.b32.xlu0 %v1750, 124
        %v2067 = vpop.permute.xlu0 %2066
        %2068 = vrot.lane.b32.xlu0 %v1751, 124
        %v2069 = vpop.permute.xlu0 %2068
        %2070 = vrot.lane.b32.xlu0 %v1752, 124
        %v2071 = vpop.permute.xlu0 %2070
        %2072 = vrot.lane.b32.xlu0 %v1753, 124
        %v2073 = vpop.permute.xlu0 %2072
        %v2074 = vadd.s32 %v410, 4
        %vm2075 = vcmp.ge.s32.totalorder %v2074, 0
        %vm2076 = vcmp.lt.s32.totalorder %v2074, 128
        %vm2077 = vmand %vm2075, %vm2076
        %v2078 = vsel %vm2077, 1, 0
        %v2079 = vcvt.s32.f32 %v2078
        %v2080 = vmul.f32 %v2067, %v2079
        %v2081 = vmul.f32 %v2069, %v2079
        %v2082 = vmul.f32 %v2071, %v2079
        %v2083 = vmul.f32 %v2073, %v2079
        %v2084 = vpack.c.bf16 %v2081, %v2080
        %v2085 = vpack.c.bf16 %v2083, %v2082
        %v2094 = vunpack.c.l.b16 %v2058
        %v2095 = vunpack.c.l.b16 %v2059
        %v2096 = vunpack.c.l.b16 %v2060
        %v2097 = vunpack.c.l.b16 %v2061
        %v2098 = vunpack.c.l.b16 %v2062
        %v2099 = vunpack.c.l.b16 %v2063
        %v2100 = vunpack.c.l.b16 %v2064
        %v2101 = vunpack.c.l.b16 %v2065
        %v2102 = vpack.c.b16 %v2095, %v2094
        %v2103 = vpack.c.b16 %v2097, %v2096
        %v2104 = vpack.c.b16 %v2099, %v2098
        %v2105 = vpack.c.b16 %v2101, %v2100
        %v2107 = vsel %vm565, %v2102, 0
        %v2110 = vsel %vm565, %v2103, 0
        %v2113 = vsel %vm565, %v2104, 0
        %v2116 = vsel %vm565, %v2105, 0
        %2118 = vmatprep.subr.bf16.mxu0 0
        %2119 = vmatpush1.bf16.msra.mxu0 0
        %2120 = vmatprep.subr.bf16.mxu0 0
        %2121 = vmatpush1.bf16.msra.mxu0 0
        %2122 = vmatprep.subr.bf16.mxu0 0
        %2123 = vmatpush1.bf16.msra.mxu0 0
        %2124 = vmatprep.subr.bf16.mxu0 0
        %2125 = vmatpush1.bf16.msra.mxu0 0
        %2126 = vmatprep.subr.bf16.mxu0 0
        %2127 = vmatpush1.bf16.msra.mxu0 0
        %2128 = vmatprep.subr.bf16.mxu0 0
        %2129 = vmatpush1.bf16.msra.mxu0 0
        %2130 = vmatprep.subr.bf16.mxu0 0
        %2131 = vmatpush1.bf16.msra.mxu0 %v2085
        %2132 = vmatprep.subr.bf16.mxu0 0
        %2133 = vmatpush1.bf16.msra.mxu0 %v2084
        %2134 = vmatprep.subr.bf16.mxu0 0
        %2135 = vmatpush2.bf16.msra.mxu0 0
        %2136 = vmatprep.subr.bf16.mxu0 0
        %2137 = vmatpush2.bf16.msra.mxu0 0
        %2138 = vmatprep.subr.bf16.mxu0 0
        %2139 = vmatpush2.bf16.msra.mxu0 0
        %2140 = vmatprep.subr.bf16.mxu0 0
        %2141 = vmatpush2.bf16.msra.mxu0 0
        %2142 = vmatprep.subr.bf16.mxu0 0
        %2143 = vmatpush2.bf16.msra.mxu0 0
        %2144 = vmatprep.subr.bf16.mxu0 0
        %2145 = vmatpush2.bf16.msra.mxu0 0
        %2146 = vmatprep.subr.bf16.mxu0 0
        %2147 = vmatpush2.bf16.msra.mxu0 0
        %2148 = vmatprep.subr.bf16.mxu0 0
        %2149 = vmatpush2.bf16.msra.mxu0 0
        %2150 = vmatprep.mubr.bf16.mxu0 0
        %2151 = vmatmul.mubr.bf16.gmra.mxu0 %v2107
        %v2152 = vpop.f32.mrf.mxu0
        %v2153 = vadd.f32 0.0, %v2152
        %v2154 = vpop.f32.mrf.mxu0
        %v2155 = vpop.f32.mrf.mxu0
        %v2156 = vadd.f32 0.0, %v2155
        %v2157 = vpop.f32.mrf.mxu0
        %2158 = vmatprep.mubr.bf16.mxu0 0
        %2159 = vmatmul.mubr.bf16.gmra.mxu0 %v2110
        %v2160 = vpop.f32.mrf.mxu0
        %v2161 = vadd.f32 0.0, %v2160
        %v2162 = vpop.f32.mrf.mxu0
        %v2163 = vpop.f32.mrf.mxu0
        %v2164 = vadd.f32 0.0, %v2163
        %v2165 = vpop.f32.mrf.mxu0
        %2166 = vmatprep.mubr.bf16.mxu0 0
        %2167 = vmatmul.mubr.bf16.gmra.mxu0 %v2113
        %v2168 = vpop.f32.mrf.mxu0
        %v2169 = vadd.f32 0.0, %v2168
        %v2170 = vpop.f32.mrf.mxu0
        %v2171 = vpop.f32.mrf.mxu0
        %v2172 = vadd.f32 0.0, %v2171
        %v2173 = vpop.f32.mrf.mxu0
        %2174 = vmatprep.mubr.bf16.mxu0 0
        %2175 = vmatmul.mubr.bf16.gmra.mxu0 %v2116
        %v2176 = vpop.f32.mrf.mxu0
        %v2177 = vadd.f32 0.0, %v2176
        %v2178 = vpop.f32.mrf.mxu0
        %v2179 = vpop.f32.mrf.mxu0
        %v2180 = vadd.f32 0.0, %v2179
        %v2181 = vpop.f32.mrf.mxu0
        %2182 = vdwg.mxu0
        %v2183 = vadd.f32 %v2049, %v2153
        %v2184 = vadd.f32 %v2050, %v2156
        %v2185 = vadd.f32 %v2051, %v2161
        %v2186 = vadd.f32 %v2052, %v2164
        %v2187 = vadd.f32 %v2053, %v2169
        %v2188 = vadd.f32 %v2054, %v2172
        %v2189 = vadd.f32 %v2055, %v2177
        %v2190 = vadd.f32 %v2056, %v2180
        %v2191 = vtanh.pop %v2183
        %v2192 = vtanh.pop %v2184
        %v2193 = vtanh.pop %v2185
        %v2194 = vtanh.pop %v2186
        %v2195 = vmul.f32 %v2187, 0.5
        %v2196 = vmul.f32 %v2188, 0.5
        %v2197 = vmul.f32 %v2189, 0.5
        %v2198 = vmul.f32 %v2190, 0.5
        %v2199 = vtanh.pop %v2195
        %v2200 = vtanh.pop %v2196
        %v2201 = vtanh.pop %v2197
        %v2202 = vtanh.pop %v2198
        %v2203 = vadd.f32 %v2199, 1.0
        %v2204 = vadd.f32 %v2200, 1.0
        %v2205 = vadd.f32 %v2201, 1.0
        %v2206 = vadd.f32 %v2202, 1.0
        %v2207 = vmul.f32 %v2203, 0.5
        %v2208 = vmul.f32 %v2204, 0.5
        %v2209 = vmul.f32 %v2205, 0.5
        %v2210 = vmul.f32 %v2206, 0.5
        %v2211 = vmul.f32 %v2191, %v2207
        %v2212 = vmul.f32 %v2192, %v2208
        %v2213 = vmul.f32 %v2193, %v2209
        %v2214 = vmul.f32 %v2194, %v2210
        %s2215 = scalar_lea.vmem %s6, 64
        %v2216 = vld [vmem:[%s2215] sm:$0xf]
        %v2217 = vld [vmem:[%s2215 + $0x4] sm:$0xf]
        %v2218 = vld [vmem:[%s2215 + $0x8] sm:$0xf]
        %v2219 = vld [vmem:[%s2215 + $0xc] sm:$0xf]
        %v2220 = vld [vmem:[%s2215 + $0x10] sm:$0xf]
        %v2221 = vld [vmem:[%s2215 + $0x14] sm:$0xf]
        %v2222 = vld [vmem:[%s2215 + $0x18] sm:$0xf]
        %v2223 = vld [vmem:[%s2215 + $0x1c] sm:$0xf]
        %v2224 = vpack.c.bf16 %v2212, %v2211
        %v2225 = vpack.c.bf16 %v2214, %v2213
        %s2226 = scalar_lea.vmem %s7, 128
        %v2227 = vld [vmem:[%s2226] sm:$0xff]
        %v2228 = vld [vmem:[%s2226 + $0x8] sm:$0xff]
        %v2229 = vld [vmem:[%s2226 + $0x10] sm:$0xff]
        %v2230 = vld [vmem:[%s2226 + $0x18] sm:$0xff]
        %v2231 = vld [vmem:[%s2226 + $0x20] sm:$0xff]
        %v2232 = vld [vmem:[%s2226 + $0x28] sm:$0xff]
        %v2233 = vld [vmem:[%s2226 + $0x30] sm:$0xff]
        %v2234 = vld [vmem:[%s2226 + $0x38] sm:$0xff]
        %2236 = vset.pattern.permute.xlu0 0
        %2237 = vperm.xlu0 %2236, %v2227
        %v2238 = vpop.permute.xlu0 %2237
        %2240 = vset.pattern.permute.xlu0 0
        %2241 = vperm.xlu0 %2240, %v2228
        %v2242 = vpop.permute.xlu0 %2241
        %2244 = vset.pattern.permute.xlu0 0
        %2245 = vperm.xlu0 %2244, %v2229
        %v2246 = vpop.permute.xlu0 %2245
        %2248 = vset.pattern.permute.xlu0 0
        %2249 = vperm.xlu0 %2248, %v2230
        %v2250 = vpop.permute.xlu0 %2249
        %2252 = vset.pattern.permute.xlu0 0
        %2253 = vperm.xlu0 %2252, %v2231
        %v2254 = vpop.permute.xlu0 %2253
        %2257 = vset.pattern.permute.xlu0 0
        %2258 = vperm.xlu0 %2257, %v2232
        %v2259 = vpop.permute.xlu0 %2258
        %2262 = vset.pattern.permute.xlu0 0
        %2263 = vperm.xlu0 %2262, %v2233
        %v2264 = vpop.permute.xlu0 %2263
        %2267 = vset.pattern.permute.xlu0 0
        %2268 = vperm.xlu0 %2267, %v2234
        %v2269 = vpop.permute.xlu0 %2268
        %v2279 = vunpack.c.l.b16 %v2216
        %v2280 = vunpack.c.l.b16 %v2217
        %v2281 = vunpack.c.l.b16 %v2218
        %v2282 = vunpack.c.l.b16 %v2219
        %v2283 = vunpack.c.l.b16 %v2220
        %v2284 = vunpack.c.l.b16 %v2221
        %v2285 = vunpack.c.l.b16 %v2222
        %v2286 = vunpack.c.l.b16 %v2223
        %v2287 = vpack.c.b16 %v2280, %v2279
        %v2288 = vpack.c.b16 %v2282, %v2281
        %v2289 = vpack.c.b16 %v2284, %v2283
        %v2290 = vpack.c.b16 %v2286, %v2285
        %v2292 = vsel %vm565, %v2287, 0
        %v2295 = vsel %vm565, %v2288, 0
        %v2298 = vsel %vm565, %v2289, 0
        %v2301 = vsel %vm565, %v2290, 0
        %2303 = vmatprep.subr.bf16.mxu0 0
        %2304 = vmatpush1.bf16.msra.mxu0 0
        %2305 = vmatprep.subr.bf16.mxu0 0
        %2306 = vmatpush1.bf16.msra.mxu0 0
        %2307 = vmatprep.subr.bf16.mxu0 0
        %2308 = vmatpush1.bf16.msra.mxu0 0
        %2309 = vmatprep.subr.bf16.mxu0 0
        %2310 = vmatpush1.bf16.msra.mxu0 0
        %2311 = vmatprep.subr.bf16.mxu0 0
        %2312 = vmatpush1.bf16.msra.mxu0 0
        %2313 = vmatprep.subr.bf16.mxu0 0
        %2314 = vmatpush1.bf16.msra.mxu0 0
        %2315 = vmatprep.subr.bf16.mxu0 0
        %2316 = vmatpush1.bf16.msra.mxu0 %v2225
        %2317 = vmatprep.subr.bf16.mxu0 0
        %2318 = vmatpush1.bf16.msra.mxu0 %v2224
        %2319 = vmatprep.subr.bf16.mxu0 0
        %2320 = vmatpush2.bf16.msra.mxu0 0
        %2321 = vmatprep.subr.bf16.mxu0 0
        %2322 = vmatpush2.bf16.msra.mxu0 0
        %2323 = vmatprep.subr.bf16.mxu0 0
        %2324 = vmatpush2.bf16.msra.mxu0 0
        %2325 = vmatprep.subr.bf16.mxu0 0
        %2326 = vmatpush2.bf16.msra.mxu0 0
        %2327 = vmatprep.subr.bf16.mxu0 0
        %2328 = vmatpush2.bf16.msra.mxu0 0
        %2329 = vmatprep.subr.bf16.mxu0 0
        %2330 = vmatpush2.bf16.msra.mxu0 0
        %2331 = vmatprep.subr.bf16.mxu0 0
        %2332 = vmatpush2.bf16.msra.mxu0 0
        %2333 = vmatprep.subr.bf16.mxu0 0
        %2334 = vmatpush2.bf16.msra.mxu0 0
        %2335 = vmatprep.mubr.bf16.mxu0 0
        %2336 = vmatmul.mubr.bf16.gmra.mxu0 %v2292
        %v2337 = vpop.f32.mrf.mxu0
        %v2338 = vpop.f32.mrf.mxu0
        %v2339 = vpop.f32.mrf.mxu0
        %v2340 = vpop.f32.mrf.mxu0
        %2341 = vmatprep.mubr.bf16.mxu0 0
        %2342 = vmatmul.mubr.bf16.gmra.mxu0 %v2295
        %v2343 = vpop.f32.mrf.mxu0
        %v2344 = vpop.f32.mrf.mxu0
        %v2345 = vpop.f32.mrf.mxu0
        %v2346 = vpop.f32.mrf.mxu0
        %2347 = vmatprep.mubr.bf16.mxu0 0
        %2348 = vmatmul.mubr.bf16.gmra.mxu0 %v2298
        %v2349 = vpop.f32.mrf.mxu0
        %v2350 = vadd.f32 %v2254, %v2349
        %v2351 = vpop.f32.mrf.mxu0
        %v2352 = vpop.f32.mrf.mxu0
        %v2353 = vadd.f32 %v2259, %v2352
        %v2354 = vpop.f32.mrf.mxu0
        %2355 = vmatprep.mubr.bf16.mxu0 0
        %2356 = vmatmul.mubr.bf16.gmra.mxu0 %v2301
        %v2357 = vpop.f32.mrf.mxu0
        %v2358 = vadd.f32 %v2264, %v2357
        %v2359 = vpop.f32.mrf.mxu0
        %v2360 = vpop.f32.mrf.mxu0
        %v2361 = vadd.f32 %v2269, %v2360
        %v2362 = vpop.f32.mrf.mxu0
        %2363 = vdwg.mxu0
        %v2364 = vadd.f32 %v1754, %v2350
        %v2365 = vadd.f32 %v1755, %v2353
        %v2366 = vadd.f32 %v1756, %v2358
        %v2367 = vadd.f32 %v1757, %v2361
        %v2368 = vmul.f32 %v2364, %v503
        %v2369 = vmul.f32 %v2365, %v503
        %v2370 = vmul.f32 %v2366, %v503
        %v2371 = vmul.f32 %v2367, %v503
        %v2372 = vld [vmem:[%s8] sm:$0x3]
        %v2373 = vpack.c.bf16 %v2369, %v2368
        %v2374 = vpack.c.bf16 %v2371, %v2370
        %v2375 = vld [vmem:[%s9] sm:$0xf]
        %2377 = vset.pattern.permute.xlu0 0
        %2378 = vperm.xlu0 %2377, %v2375
        %v2379 = vpop.permute.xlu0 %2378
        %v2382 = vsel %vm565, %v2372, 0
        %2384 = vmatprep.subr.bf16.mxu0 0
        %2385 = vmatpush1.bf16.msra.mxu0 0
        %2386 = vmatprep.subr.bf16.mxu0 0
        %2387 = vmatpush1.bf16.msra.mxu0 0
        %2388 = vmatprep.subr.bf16.mxu0 0
        %2389 = vmatpush1.bf16.msra.mxu0 0
        %2390 = vmatprep.subr.bf16.mxu0 0
        %2391 = vmatpush1.bf16.msra.mxu0 0
        %2392 = vmatprep.subr.bf16.mxu0 0
        %2393 = vmatpush1.bf16.msra.mxu0 0
        %2394 = vmatprep.subr.bf16.mxu0 0
        %2395 = vmatpush1.bf16.msra.mxu0 0
        %2396 = vmatprep.subr.bf16.mxu0 0
        %2397 = vmatpush1.bf16.msra.mxu0 %v2374
        %2398 = vmatprep.subr.bf16.mxu0 0
        %2399 = vmatpush1.bf16.msra.mxu0 %v2373
        %2400 = vmatprep.subr.bf16.mxu0 0
        %2401 = vmatpush2.bf16.msra.mxu0 0
        %2402 = vmatprep.subr.bf16.mxu0 0
        %2403 = vmatpush2.bf16.msra.mxu0 0
        %2404 = vmatprep.subr.bf16.mxu0 0
        %2405 = vmatpush2.bf16.msra.mxu0 0
        %2406 = vmatprep.subr.bf16.mxu0 0
        %2407 = vmatpush2.bf16.msra.mxu0 0
        %2408 = vmatprep.subr.bf16.mxu0 0
        %2409 = vmatpush2.bf16.msra.mxu0 0
        %2410 = vmatprep.subr.bf16.mxu0 0
        %2411 = vmatpush2.bf16.msra.mxu0 0
        %2412 = vmatprep.subr.bf16.mxu0 0
        %2413 = vmatpush2.bf16.msra.mxu0 0
        %2414 = vmatprep.subr.bf16.mxu0 0
        %2415 = vmatpush2.bf16.msra.mxu0 0
        %2416 = vmatprep.mubr.bf16.mxu0 0
        %2417 = vmatmul.mubr.bf16.gmra.mxu0 %v2382
        %v2418 = vpop.f32.mrf.mxu0
        %v2419 = vadd.f32 %v2379, %v2418
        %v2420 = vpop.f32.mrf.mxu0
        %v2421 = vpop.f32.mrf.mxu0
        %v2422 = vpop.f32.mrf.mxu0
        %2423 = vdwg.mxu0
        %v2424 = vmul.f32 %v2419, %v503
        %v2425 = vmul.f32 %v2424, 1.442695
        %v2426 = vpow.pop %v2425
        %v2428 = vrot.slane %v2426, 2
        %v2430 = vmul.f32 %v407, %v2428
        %v2431 = vmul.f32 %v2430, %v503
        %v2432 = vadd.f32 %v2424, %v2431
        %2433 = vst [vmem:[%s389] sm:$0x3] %v406
        %2434 = vst [vmem:[%s389 + $0x2] sm:$0x3] %v2432
        %v2436 = vrot.slane %v2424, 2
        %vm2438 = vcmask 1041408
        %v2439 = vsel %vm2438, %v2436, 0.0
        %v2440 = vrot.slane %v2439, 4
        %v2441 = vadd.f32 %v2439, %v2440
        %v2442 = vrot.slane %v2441, 2
        %v2443 = vadd.f32 %v2441, %v2442
        %v2444 = vrot.slane %v2443, 1
        %v2445 = vadd.f32 %v2443, %v2444
        %2446 = vst [vmem:[%s404] sm:$0x1] %v2445
        %s2447 = sand.u32 %s254, 1
        %s2448 = scalar_lea.sflag [#allocation3], %s2447
        %s2449 = sand.u32 %s254, 1
        %s2450 = smul.addr %s2449, 4
        %s2451 = scalar_lea.vmem [#allocation2], %s2450
        %p2452 = scmp.lt.s32.totalorder %s26, 1
        %s2453 = scalar_select %p2452, %s26, 1
        %s2454 = scalar_lea.vmem %s11, %s2453
        // Predicated region
        $region61: #{residual_coupling_forward.1} parent=59 // pred_check
          %p2455 = pneg %p264
        $region62: #{residual_coupling_forward.1} parent=59 // pred_check_branch
          %2457 = sbr.rel (%p2455) target = $region64
        $region63: #{residual_coupling_forward.1} parent=59 // pred_region
          %s2459 = ssub.s32 64, 64
          %2460 = vsyncadd %s2448, %s2459
          %s2461 = smul.addr %s26, 64
          %s2462 = scalar_lea.hbm %s10, %s2461
          %s2464 = sshll.u32 %s2451, 4
          %s2465 = int_to_ptr.vmem [resolvable:$true] %s2464
          %2467 = dma.vmem_to_hbm [thread:$0]  %s2465, 64, %s2462, %s2448
        $region64: #{residual_coupling_forward.1} parent=59 // pred_fallthru
          _
        // Predicated region
        $region65: #{residual_coupling_forward.1} parent=59 // pred_check
          %p2468 = pneg %p290
        $region66: #{residual_coupling_forward.1} parent=59 // pred_check_branch
          %2470 = sbr.rel (%p2468) target = $region68
        $region67: #{residual_coupling_forward.1} parent=59 // pred_region
          _
        $region68: #{residual_coupling_forward.1} parent=59 // pred_fallthru
          _
      $region60: #{residual_coupling_forward.1} parent=5 // pred_fallthru
        _
      %p2471 = scmp.le.s32.totalorder 2, %s21
      // Predicated region
      $region69: #{residual_coupling_forward.1} parent=5 // pred_check
        %p2472 = pneg %p2471
      $region70: #{residual_coupling_forward.1} parent=5 // pred_check_branch
        %2474 = sbr.rel (%p2472) target = $region72
      $region71: #{residual_coupling_forward.1} parent=5 // pred_region
        %s2475 = ssub.s32 %s21, 2
        // Predicated region
        $region73: #{residual_coupling_forward.1} parent=71 // pred_check
          %p2476 = pneg %p270
        $region74: #{residual_coupling_forward.1} parent=71 // pred_check_branch
          %2478 = sbr.rel (%p2476) target = $region76
        $region75: #{residual_coupling_forward.1} parent=71 // pred_region
          %s2479 = sand.u32 %s255, 1
          %s2480 = scalar_lea.sflag [#allocation3], %s2479
          %s2481 = sand.u32 %s255, 1
          %s2482 = smul.addr %s2481, 4
          %s2483 = scalar_lea.vmem [#allocation2], %s2482
          %2484 = dma.done %s2480, 64
        $region76: #{residual_coupling_forward.1} parent=71 // pred_fallthru
          _
        // Predicated region
        $region77: #{residual_coupling_forward.1} parent=71 // pred_check
          %p2485 = pneg %p296
        $region78: #{residual_coupling_forward.1} parent=71 // pred_check_branch
          %2487 = sbr.rel (%p2485) target = $region80
        $region79: #{residual_coupling_forward.1} parent=71 // pred_region
          %p2488 = scmp.lt.s32.totalorder %s27, 1
          %s2489 = scalar_select %p2488, %s27, 1
          %s2490 = scalar_lea.vmem %s11, %s2489
        $region80: #{residual_coupling_forward.1} parent=71 // pred_fallthru
          _
      $region72: #{residual_coupling_forward.1} parent=5 // pred_fallthru
        _
    $region6: #{residual_coupling_forward.1} parent=1 // loop_footer
      %s25 = sadd.s32 1, %s21
    $region7: #{residual_coupling_forward.1} parent=1 // loop_footer_branch
      %20 = sbr.rel target = $region3
    $region8: #{residual_coupling_forward.1} parent=1 // loop_exit
      _
    %2491 = vsyncpa [#allocation3], 1
    %s2492 = scalar_lea.sflag [#allocation3], 1
    %2493 = vsyncpa %s2492, 1

</llo_original>
